<compile_context>
chip_gen: v7x
topology: tpu7x:2x2x1
jax: 0.10.0
libtpu: 0.0.40
codegen_flags: <defaults>
</compile_context>

<pallas_src>
import math

import jax
import jax.numpy as jnp
from jax import lax
from jax.experimental import pallas as pl
from jax.experimental.pallas import tpu as pltpu


K_GROUP = 4      # partial accumulators (ILP on the VALU)
SUB = 8          # sublanes per register-resident chunk (one vreg sublane group)
LANES = 512      # slab / block lane width (multiple of 128); chunk = 4 f32 vregs


def _ufunc_kernel(x_ref, ksai_ref, w_ref, o_ref):
    # x_ref / o_ref : (block_rows, LANES) f32 in VMEM, sublane- and lane-dense.
    # ksai_ref/w_ref: (K_pad,) f32 scalars in SMEM, K_pad % 4 == 0.
    block_rows = x_ref.shape[0]
    n_chunks = block_rows // SUB
    n_groups = ksai_ref.shape[0] // K_GROUP

    @pl.loop(0, n_chunks)
    def _(c):
        r = pl.multiple_of(c * SUB, SUB)
        x = x_ref[pl.ds(r, SUB), :]                 # (8, 512) = 4 f32 vregs

        def k_body(g, accs):
            a0, a1, a2, a3 = accs
            k = g * K_GROUP
            # SMEM scalars broadcast as scalar operands (free); 4 independent
            # accumulator chains keep all VALU slots busy.
            a0 = a0 + w_ref[k + 0] * jnp.abs(x - ksai_ref[k + 0])
            a1 = a1 + w_ref[k + 1] * jnp.abs(x - ksai_ref[k + 1])
            a2 = a2 + w_ref[k + 2] * jnp.abs(x - ksai_ref[k + 2])
            a3 = a3 + w_ref[k + 3] * jnp.abs(x - ksai_ref[k + 3])
            return (a0, a1, a2, a3)

        zero = jnp.zeros_like(x)
        a0, a1, a2, a3 = lax.fori_loop(
            0, n_groups, k_body, (zero, zero, zero, zero), unroll=True)

        xs = x * 0.1                                # (x/10)^2 without a divide
        o_ref[pl.ds(r, SUB), :] = xs * xs + ((a0 + a1) + (a2 + a3))


def my_ufunc(x, ksai, weight):
    """x: (N, 1) f32; ksai: (K,) f32; weight: (1, K) f32  ->  (N, 1) f32."""
    n = x.shape[0]

    x_flat = x.reshape(-1).astype(jnp.float32)          # (N,)
    ksai_flat = ksai.reshape(-1).astype(jnp.float32)    # (K,)
    w_flat = weight.reshape(-1).astype(jnp.float32)     # (K,)

    # Pad K to a multiple of 4; zero weights contribute nothing.
    k = ksai_flat.shape[0]
    k_pad = pl.cdiv(k, K_GROUP) * K_GROUP
    if k_pad != k:
        ksai_flat = jnp.pad(ksai_flat, (0, k_pad - k))
        w_flat = jnp.pad(w_flat, (0, k_pad - k))

    # Sublane- and lane-dense slab: (rows_pad, LANES), rows_pad % block_rows == 0.
    rows = pl.cdiv(n, LANES)
    rows8 = pl.cdiv(rows, SUB) * SUB
    # Adapt block height so realistic N gets >= 2 grid steps (v7x: 2 TCs),
    # while each block stays a few tens of KiB of VMEM.
    if rows8 >= 64:
        block_rows = 32
    elif rows8 >= 32:
        block_rows = 16
    else:
        block_rows = 8
    rows_pad = pl.cdiv(rows8, block_rows) * block_rows
    n_pad = rows_pad * LANES

    x_slab = jnp.pad(x_flat, (0, n_pad - n)).reshape(rows_pad, LANES)

    grid = (rows_pad // block_rows,)

    out = pl.pallas_call(
        _ufunc_kernel,
        out_shape=jax.ShapeDtypeStruct((rows_pad, LANES), jnp.float32),
        grid=grid,
        in_specs=[
            pl.BlockSpec((block_rows, LANES), lambda i: (i, 0)),      # x slab
            pl.BlockSpec(memory_space=pltpu.MemorySpace.SMEM),        # ksai
            pl.BlockSpec(memory_space=pltpu.MemorySpace.SMEM),        # weight
        ],
        out_specs=pl.BlockSpec((block_rows, LANES), lambda i: (i, 0)),
        compiler_params=pltpu.CompilerParams(
            dimension_semantics=("parallel",),   # shards row-blocks across v7x TCs
        ),
    )(x_slab, ksai_flat, w_flat)

    # Pad-tail rows compute garbage energies; they are sliced away here.
    return out.reshape(-1)[:n].reshape(n, 1)


def reference(x, ksai, weight):
    h = jnp.abs(x - ksai.reshape(1, -1))        # (N, K)
    lin = h @ weight.T                          # (N, 1)
    return (x / 10.0) ** 2 + lin


if __name__ == "__main__":
    key = jax.random.PRNGKey(0)
    kx, kw = jax.random.split(key)

    # ksai = arange(-4, 4, 0.1) -> K = 80; integer-robust count.
    K = int(round((4.0 - (-4.0)) / 0.1))        # 80
    ksai = (-4.0 + 0.1 * jnp.arange(K, dtype=jnp.float32))

    # Deterministic parameter init (matches init_theta: N(0, 1)), shape (1, K).
    weight = jax.random.normal(kw, (1, K), dtype=jnp.float32)

    # Small batch of scalar inputs, shape (N, 1).
    N = 8
    x = jax.random.normal(kx, (N, 1), dtype=jnp.float32) * 3.0

    out = my_ufunc(x, ksai, weight)
    jax.block_until_ready(out)

    ref = reference(x, ksai, weight)
    assert out.shape == (N, 1)
    assert jnp.allclose(out, ref, atol=1e-5, rtol=1e-5)

    # Second check: larger batch exercises multi-block grid (grid >= 2) and the
    # in-kernel chunk loop / pad-tail slicing.
    N2 = 5000
    x2 = jax.random.normal(kx, (N2, 1), dtype=jnp.float32) * 3.0
    out2 = my_ufunc(x2, ksai, weight)
    jax.block_until_ready(out2)
    ref2 = reference(x2, ksai, weight)
    assert out2.shape == (N2, 1)
    assert jnp.allclose(out2, ref2, atol=1e-5, rtol=1e-5)

    print("KERNEL_OK")
</pallas_src>

<mosaic_0001>
module attributes {stable_mosaic.version = 11 : i64} {
  func.func @_ufunc_kernel(%arg0: i32, %arg1: memref<8x512xf32, #tpu.memory_space<vmem>>, %arg2: memref<80xf32, #tpu.memory_space<smem>>, %arg3: memref<80xf32, #tpu.memory_space<smem>>, %arg4: memref<8x512xf32, #tpu.memory_space<vmem>>) attributes {dimension_semantics = [#tpu.dimension_semantics<parallel>], iteration_bounds = array<i64: 1>, scalar_prefetch = 0 : i64, scratch_operands = 0 : i64, tpu.core_type = #tpu.core_type<tc>, window_params = [{transform_indices = @transform_0, window_bounds = array<i64: 8, 512>}, {transform_indices = @transform_1, window_bounds = array<i64: 80>}, {transform_indices = @transform_2, window_bounds = array<i64: 80>}, {transform_indices = @transform_3, window_bounds = array<i64: 8, 512>}]} {
    %c0_i32 = arith.constant 0 : i32
    %c1_i32 = arith.constant 1 : i32
    %0 = arith.muli %c0_i32, %c1_i32 : i32
    %c0_i32_0 = arith.constant 0 : i32
    %1 = arith.addi %c0_i32_0, %0 : i32
    %c8_i32 = arith.constant 8 : i32
    %2 = arith.muli %1, %c8_i32 : i32
    %3 = tpu.assume_multiple %2, 8 : i32
    %4 = arith.index_cast %3 : i32 to index
    %c0 = arith.constant 0 : index
    %5 = vector.load %arg1[%4, %c0] : memref<8x512xf32, #tpu.memory_space<vmem>>, vector<8x512xf32>
    %cst = arith.constant 0.000000e+00 : f32
    %6 = vector.broadcast %cst : f32 to vector<8x512xf32>
    %c0_i32_1 = arith.constant 0 : i32
    %c4_i32 = arith.constant 4 : i32
    %7 = arith.muli %c0_i32_1, %c4_i32 : i32
    %c0_i32_2 = arith.constant 0 : i32
    %8 = arith.addi %7, %c0_i32_2 : i32
    %9 = arith.index_cast %8 : i32 to index
    %10 = memref.load %arg3[%9] : memref<80xf32, #tpu.memory_space<smem>>
    %c0_i32_3 = arith.constant 0 : i32
    %11 = arith.addi %7, %c0_i32_3 : i32
    %12 = arith.index_cast %11 : i32 to index
    %13 = memref.load %arg2[%12] : memref<80xf32, #tpu.memory_space<smem>>
    %14 = vector.broadcast %13 : f32 to vector<8x512xf32>
    %15 = arith.subf %5, %14 : vector<8x512xf32>
    %16 = math.absf %15 : vector<8x512xf32>
    %17 = vector.broadcast %10 : f32 to vector<8x512xf32>
    %18 = arith.mulf %17, %16 : vector<8x512xf32>
    %19 = arith.addf %6, %18 : vector<8x512xf32>
    %c1_i32_4 = arith.constant 1 : i32
    %20 = arith.addi %7, %c1_i32_4 : i32
    %21 = arith.index_cast %20 : i32 to index
    %22 = memref.load %arg3[%21] : memref<80xf32, #tpu.memory_space<smem>>
    %c1_i32_5 = arith.constant 1 : i32
    %23 = arith.addi %7, %c1_i32_5 : i32
    %24 = arith.index_cast %23 : i32 to index
    %25 = memref.load %arg2[%24] : memref<80xf32, #tpu.memory_space<smem>>
    %26 = vector.broadcast %25 : f32 to vector<8x512xf32>
    %27 = arith.subf %5, %26 : vector<8x512xf32>
    %28 = math.absf %27 : vector<8x512xf32>
    %29 = vector.broadcast %22 : f32 to vector<8x512xf32>
    %30 = arith.mulf %29, %28 : vector<8x512xf32>
    %31 = arith.addf %6, %30 : vector<8x512xf32>
    %c2_i32 = arith.constant 2 : i32
    %32 = arith.addi %7, %c2_i32 : i32
    %33 = arith.index_cast %32 : i32 to index
    %34 = memref.load %arg3[%33] : memref<80xf32, #tpu.memory_space<smem>>
    %c2_i32_6 = arith.constant 2 : i32
    %35 = arith.addi %7, %c2_i32_6 : i32
    %36 = arith.index_cast %35 : i32 to index
    %37 = memref.load %arg2[%36] : memref<80xf32, #tpu.memory_space<smem>>
    %38 = vector.broadcast %37 : f32 to vector<8x512xf32>
    %39 = arith.subf %5, %38 : vector<8x512xf32>
    %40 = math.absf %39 : vector<8x512xf32>
    %41 = vector.broadcast %34 : f32 to vector<8x512xf32>
    %42 = arith.mulf %41, %40 : vector<8x512xf32>
    %43 = arith.addf %6, %42 : vector<8x512xf32>
    %c3_i32 = arith.constant 3 : i32
    %44 = arith.addi %7, %c3_i32 : i32
    %45 = arith.index_cast %44 : i32 to index
    %46 = memref.load %arg3[%45] : memref<80xf32, #tpu.memory_space<smem>>
    %c3_i32_7 = arith.constant 3 : i32
    %47 = arith.addi %7, %c3_i32_7 : i32
    %48 = arith.index_cast %47 : i32 to index
    %49 = memref.load %arg2[%48] : memref<80xf32, #tpu.memory_space<smem>>
    %50 = vector.broadcast %49 : f32 to vector<8x512xf32>
    %51 = arith.subf %5, %50 : vector<8x512xf32>
    %52 = math.absf %51 : vector<8x512xf32>
    %53 = vector.broadcast %46 : f32 to vector<8x512xf32>
    %54 = arith.mulf %53, %52 : vector<8x512xf32>
    %55 = arith.addf %6, %54 : vector<8x512xf32>
    %c1_i32_8 = arith.constant 1 : i32
    %c4_i32_9 = arith.constant 4 : i32
    %56 = arith.muli %c1_i32_8, %c4_i32_9 : i32
    %c0_i32_10 = arith.constant 0 : i32
    %57 = arith.addi %56, %c0_i32_10 : i32
    %58 = arith.index_cast %57 : i32 to index
    %59 = memref.load %arg3[%58] : memref<80xf32, #tpu.memory_space<smem>>
    %c0_i32_11 = arith.constant 0 : i32
    %60 = arith.addi %56, %c0_i32_11 : i32
    %61 = arith.index_cast %60 : i32 to index
    %62 = memref.load %arg2[%61] : memref<80xf32, #tpu.memory_space<smem>>
    %63 = vector.broadcast %62 : f32 to vector<8x512xf32>
    %64 = arith.subf %5, %63 : vector<8x512xf32>
    %65 = math.absf %64 : vector<8x512xf32>
    %66 = vector.broadcast %59 : f32 to vector<8x512xf32>
    %67 = arith.mulf %66, %65 : vector<8x512xf32>
    %68 = arith.addf %19, %67 : vector<8x512xf32>
    %c1_i32_12 = arith.constant 1 : i32
    %69 = arith.addi %56, %c1_i32_12 : i32
    %70 = arith.index_cast %69 : i32 to index
    %71 = memref.load %arg3[%70] : memref<80xf32, #tpu.memory_space<smem>>
    %c1_i32_13 = arith.constant 1 : i32
    %72 = arith.addi %56, %c1_i32_13 : i32
    %73 = arith.index_cast %72 : i32 to index
    %74 = memref.load %arg2[%73] : memref<80xf32, #tpu.memory_space<smem>>
    %75 = vector.broadcast %74 : f32 to vector<8x512xf32>
    %76 = arith.subf %5, %75 : vector<8x512xf32>
    %77 = math.absf %76 : vector<8x512xf32>
    %78 = vector.broadcast %71 : f32 to vector<8x512xf32>
    %79 = arith.mulf %78, %77 : vector<8x512xf32>
    %80 = arith.addf %31, %79 : vector<8x512xf32>
    %c2_i32_14 = arith.constant 2 : i32
    %81 = arith.addi %56, %c2_i32_14 : i32
    %82 = arith.index_cast %81 : i32 to index
    %83 = memref.load %arg3[%82] : memref<80xf32, #tpu.memory_space<smem>>
    %c2_i32_15 = arith.constant 2 : i32
    %84 = arith.addi %56, %c2_i32_15 : i32
    %85 = arith.index_cast %84 : i32 to index
    %86 = memref.load %arg2[%85] : memref<80xf32, #tpu.memory_space<smem>>
    %87 = vector.broadcast %86 : f32 to vector<8x512xf32>
    %88 = arith.subf %5, %87 : vector<8x512xf32>
    %89 = math.absf %88 : vector<8x512xf32>
    %90 = vector.broadcast %83 : f32 to vector<8x512xf32>
    %91 = arith.mulf %90, %89 : vector<8x512xf32>
    %92 = arith.addf %43, %91 : vector<8x512xf32>
    %c3_i32_16 = arith.constant 3 : i32
    %93 = arith.addi %56, %c3_i32_16 : i32
    %94 = arith.index_cast %93 : i32 to index
    %95 = memref.load %arg3[%94] : memref<80xf32, #tpu.memory_space<smem>>
    %c3_i32_17 = arith.constant 3 : i32
    %96 = arith.addi %56, %c3_i32_17 : i32
    %97 = arith.index_cast %96 : i32 to index
    %98 = memref.load %arg2[%97] : memref<80xf32, #tpu.memory_space<smem>>
    %99 = vector.broadcast %98 : f32 to vector<8x512xf32>
    %100 = arith.subf %5, %99 : vector<8x512xf32>
    %101 = math.absf %100 : vector<8x512xf32>
    %102 = vector.broadcast %95 : f32 to vector<8x512xf32>
    %103 = arith.mulf %102, %101 : vector<8x512xf32>
    %104 = arith.addf %55, %103 : vector<8x512xf32>
    %c2_i32_18 = arith.constant 2 : i32
    %c4_i32_19 = arith.constant 4 : i32
    %105 = arith.muli %c2_i32_18, %c4_i32_19 : i32
    %c0_i32_20 = arith.constant 0 : i32
    %106 = arith.addi %105, %c0_i32_20 : i32
    %107 = arith.index_cast %106 : i32 to index
    %108 = memref.load %arg3[%107] : memref<80xf32, #tpu.memory_space<smem>>
    %c0_i32_21 = arith.constant 0 : i32
    %109 = arith.addi %105, %c0_i32_21 : i32
    %110 = arith.index_cast %109 : i32 to index
    %111 = memref.load %arg2[%110] : memref<80xf32, #tpu.memory_space<smem>>
    %112 = vector.broadcast %111 : f32 to vector<8x512xf32>
    %113 = arith.subf %5, %112 : vector<8x512xf32>
    %114 = math.absf %113 : vector<8x512xf32>
    %115 = vector.broadcast %108 : f32 to vector<8x512xf32>
    %116 = arith.mulf %115, %114 : vector<8x512xf32>
    %117 = arith.addf %68, %116 : vector<8x512xf32>
    %c1_i32_22 = arith.constant 1 : i32
    %118 = arith.addi %105, %c1_i32_22 : i32
    %119 = arith.index_cast %118 : i32 to index
    %120 = memref.load %arg3[%119] : memref<80xf32, #tpu.memory_space<smem>>
    %c1_i32_23 = arith.constant 1 : i32
    %121 = arith.addi %105, %c1_i32_23 : i32
    %122 = arith.index_cast %121 : i32 to index
    %123 = memref.load %arg2[%122] : memref<80xf32, #tpu.memory_space<smem>>
    %124 = vector.broadcast %123 : f32 to vector<8x512xf32>
    %125 = arith.subf %5, %124 : vector<8x512xf32>
    %126 = math.absf %125 : vector<8x512xf32>
    %127 = vector.broadcast %120 : f32 to vector<8x512xf32>
    %128 = arith.mulf %127, %126 : vector<8x512xf32>
    %129 = arith.addf %80, %128 : vector<8x512xf32>
    %c2_i32_24 = arith.constant 2 : i32
    %130 = arith.addi %105, %c2_i32_24 : i32
    %131 = arith.index_cast %130 : i32 to index
    %132 = memref.load %arg3[%131] : memref<80xf32, #tpu.memory_space<smem>>
    %c2_i32_25 = arith.constant 2 : i32
    %133 = arith.addi %105, %c2_i32_25 : i32
    %134 = arith.index_cast %133 : i32 to index
    %135 = memref.load %arg2[%134] : memref<80xf32, #tpu.memory_space<smem>>
    %136 = vector.broadcast %135 : f32 to vector<8x512xf32>
    %137 = arith.subf %5, %136 : vector<8x512xf32>
    %138 = math.absf %137 : vector<8x512xf32>
    %139 = vector.broadcast %132 : f32 to vector<8x512xf32>
    %140 = arith.mulf %139, %138 : vector<8x512xf32>
    %141 = arith.addf %92, %140 : vector<8x512xf32>
    %c3_i32_26 = arith.constant 3 : i32
    %142 = arith.addi %105, %c3_i32_26 : i32
    %143 = arith.index_cast %142 : i32 to index
    %144 = memref.load %arg3[%143] : memref<80xf32, #tpu.memory_space<smem>>
    %c3_i32_27 = arith.constant 3 : i32
    %145 = arith.addi %105, %c3_i32_27 : i32
    %146 = arith.index_cast %145 : i32 to index
    %147 = memref.load %arg2[%146] : memref<80xf32, #tpu.memory_space<smem>>
    %148 = vector.broadcast %147 : f32 to vector<8x512xf32>
    %149 = arith.subf %5, %148 : vector<8x512xf32>
    %150 = math.absf %149 : vector<8x512xf32>
    %151 = vector.broadcast %144 : f32 to vector<8x512xf32>
    %152 = arith.mulf %151, %150 : vector<8x512xf32>
    %153 = arith.addf %104, %152 : vector<8x512xf32>
    %c3_i32_28 = arith.constant 3 : i32
    %c4_i32_29 = arith.constant 4 : i32
    %154 = arith.muli %c3_i32_28, %c4_i32_29 : i32
    %c0_i32_30 = arith.constant 0 : i32
    %155 = arith.addi %154, %c0_i32_30 : i32
    %156 = arith.index_cast %155 : i32 to index
    %157 = memref.load %arg3[%156] : memref<80xf32, #tpu.memory_space<smem>>
    %c0_i32_31 = arith.constant 0 : i32
    %158 = arith.addi %154, %c0_i32_31 : i32
    %159 = arith.index_cast %158 : i32 to index
    %160 = memref.load %arg2[%159] : memref<80xf32, #tpu.memory_space<smem>>
    %161 = vector.broadcast %160 : f32 to vector<8x512xf32>
    %162 = arith.subf %5, %161 : vector<8x512xf32>
    %163 = math.absf %162 : vector<8x512xf32>
    %164 = vector.broadcast %157 : f32 to vector<8x512xf32>
    %165 = arith.mulf %164, %163 : vector<8x512xf32>
    %166 = arith.addf %117, %165 : vector<8x512xf32>
    %c1_i32_32 = arith.constant 1 : i32
    %167 = arith.addi %154, %c1_i32_32 : i32
    %168 = arith.index_cast %167 : i32 to index
    %169 = memref.load %arg3[%168] : memref<80xf32, #tpu.memory_space<smem>>
    %c1_i32_33 = arith.constant 1 : i32
    %170 = arith.addi %154, %c1_i32_33 : i32
    %171 = arith.index_cast %170 : i32 to index
    %172 = memref.load %arg2[%171] : memref<80xf32, #tpu.memory_space<smem>>
    %173 = vector.broadcast %172 : f32 to vector<8x512xf32>
    %174 = arith.subf %5, %173 : vector<8x512xf32>
    %175 = math.absf %174 : vector<8x512xf32>
    %176 = vector.broadcast %169 : f32 to vector<8x512xf32>
    %177 = arith.mulf %176, %175 : vector<8x512xf32>
    %178 = arith.addf %129, %177 : vector<8x512xf32>
    %c2_i32_34 = arith.constant 2 : i32
    %179 = arith.addi %154, %c2_i32_34 : i32
    %180 = arith.index_cast %179 : i32 to index
    %181 = memref.load %arg3[%180] : memref<80xf32, #tpu.memory_space<smem>>
    %c2_i32_35 = arith.constant 2 : i32
    %182 = arith.addi %154, %c2_i32_35 : i32
    %183 = arith.index_cast %182 : i32 to index
    %184 = memref.load %arg2[%183] : memref<80xf32, #tpu.memory_space<smem>>
    %185 = vector.broadcast %184 : f32 to vector<8x512xf32>
    %186 = arith.subf %5, %185 : vector<8x512xf32>
    %187 = math.absf %186 : vector<8x512xf32>
    %188 = vector.broadcast %181 : f32 to vector<8x512xf32>
    %189 = arith.mulf %188, %187 : vector<8x512xf32>
    %190 = arith.addf %141, %189 : vector<8x512xf32>
    %c3_i32_36 = arith.constant 3 : i32
    %191 = arith.addi %154, %c3_i32_36 : i32
    %192 = arith.index_cast %191 : i32 to index
    %193 = memref.load %arg3[%192] : memref<80xf32, #tpu.memory_space<smem>>
    %c3_i32_37 = arith.constant 3 : i32
    %194 = arith.addi %154, %c3_i32_37 : i32
    %195 = arith.index_cast %194 : i32 to index
    %196 = memref.load %arg2[%195] : memref<80xf32, #tpu.memory_space<smem>>
    %197 = vector.broadcast %196 : f32 to vector<8x512xf32>
    %198 = arith.subf %5, %197 : vector<8x512xf32>
    %199 = math.absf %198 : vector<8x512xf32>
    %200 = vector.broadcast %193 : f32 to vector<8x512xf32>
    %201 = arith.mulf %200, %199 : vector<8x512xf32>
    %202 = arith.addf %153, %201 : vector<8x512xf32>
    %c4_i32_38 = arith.constant 4 : i32
    %c4_i32_39 = arith.constant 4 : i32
    %203 = arith.muli %c4_i32_38, %c4_i32_39 : i32
    %c0_i32_40 = arith.constant 0 : i32
    %204 = arith.addi %203, %c0_i32_40 : i32
    %205 = arith.index_cast %204 : i32 to index
    %206 = memref.load %arg3[%205] : memref<80xf32, #tpu.memory_space<smem>>
    %c0_i32_41 = arith.constant 0 : i32
    %207 = arith.addi %203, %c0_i32_41 : i32
    %208 = arith.index_cast %207 : i32 to index
    %209 = memref.load %arg2[%208] : memref<80xf32, #tpu.memory_space<smem>>
    %210 = vector.broadcast %209 : f32 to vector<8x512xf32>
    %211 = arith.subf %5, %210 : vector<8x512xf32>
    %212 = math.absf %211 : vector<8x512xf32>
    %213 = vector.broadcast %206 : f32 to vector<8x512xf32>
    %214 = arith.mulf %213, %212 : vector<8x512xf32>
    %215 = arith.addf %166, %214 : vector<8x512xf32>
    %c1_i32_42 = arith.constant 1 : i32
    %216 = arith.addi %203, %c1_i32_42 : i32
    %217 = arith.index_cast %216 : i32 to index
    %218 = memref.load %arg3[%217] : memref<80xf32, #tpu.memory_space<smem>>
    %c1_i32_43 = arith.constant 1 : i32
    %219 = arith.addi %203, %c1_i32_43 : i32
    %220 = arith.index_cast %219 : i32 to index
    %221 = memref.load %arg2[%220] : memref<80xf32, #tpu.memory_space<smem>>
    %222 = vector.broadcast %221 : f32 to vector<8x512xf32>
    %223 = arith.subf %5, %222 : vector<8x512xf32>
    %224 = math.absf %223 : vector<8x512xf32>
    %225 = vector.broadcast %218 : f32 to vector<8x512xf32>
    %226 = arith.mulf %225, %224 : vector<8x512xf32>
    %227 = arith.addf %178, %226 : vector<8x512xf32>
    %c2_i32_44 = arith.constant 2 : i32
    %228 = arith.addi %203, %c2_i32_44 : i32
    %229 = arith.index_cast %228 : i32 to index
    %230 = memref.load %arg3[%229] : memref<80xf32, #tpu.memory_space<smem>>
    %c2_i32_45 = arith.constant 2 : i32
    %231 = arith.addi %203, %c2_i32_45 : i32
    %232 = arith.index_cast %231 : i32 to index
    %233 = memref.load %arg2[%232] : memref<80xf32, #tpu.memory_space<smem>>
    %234 = vector.broadcast %233 : f32 to vector<8x512xf32>
    %235 = arith.subf %5, %234 : vector<8x512xf32>
    %236 = math.absf %235 : vector<8x512xf32>
    %237 = vector.broadcast %230 : f32 to vector<8x512xf32>
    %238 = arith.mulf %237, %236 : vector<8x512xf32>
    %239 = arith.addf %190, %238 : vector<8x512xf32>
    %c3_i32_46 = arith.constant 3 : i32
    %240 = arith.addi %203, %c3_i32_46 : i32
    %241 = arith.index_cast %240 : i32 to index
    %242 = memref.load %arg3[%241] : memref<80xf32, #tpu.memory_space<smem>>
    %c3_i32_47 = arith.constant 3 : i32
    %243 = arith.addi %203, %c3_i32_47 : i32
    %244 = arith.index_cast %243 : i32 to index
    %245 = memref.load %arg2[%244] : memref<80xf32, #tpu.memory_space<smem>>
    %246 = vector.broadcast %245 : f32 to vector<8x512xf32>
    %247 = arith.subf %5, %246 : vector<8x512xf32>
    %248 = math.absf %247 : vector<8x512xf32>
    %249 = vector.broadcast %242 : f32 to vector<8x512xf32>
    %250 = arith.mulf %249, %248 : vector<8x512xf32>
    %251 = arith.addf %202, %250 : vector<8x512xf32>
    %c5_i32 = arith.constant 5 : i32
    %c4_i32_48 = arith.constant 4 : i32
    %252 = arith.muli %c5_i32, %c4_i32_48 : i32
    %c0_i32_49 = arith.constant 0 : i32
    %253 = arith.addi %252, %c0_i32_49 : i32
    %254 = arith.index_cast %253 : i32 to index
    %255 = memref.load %arg3[%254] : memref<80xf32, #tpu.memory_space<smem>>
    %c0_i32_50 = arith.constant 0 : i32
    %256 = arith.addi %252, %c0_i32_50 : i32
    %257 = arith.index_cast %256 : i32 to index
    %258 = memref.load %arg2[%257] : memref<80xf32, #tpu.memory_space<smem>>
    %259 = vector.broadcast %258 : f32 to vector<8x512xf32>
    %260 = arith.subf %5, %259 : vector<8x512xf32>
    %261 = math.absf %260 : vector<8x512xf32>
    %262 = vector.broadcast %255 : f32 to vector<8x512xf32>
    %263 = arith.mulf %262, %261 : vector<8x512xf32>
    %264 = arith.addf %215, %263 : vector<8x512xf32>
    %c1_i32_51 = arith.constant 1 : i32
    %265 = arith.addi %252, %c1_i32_51 : i32
    %266 = arith.index_cast %265 : i32 to index
    %267 = memref.load %arg3[%266] : memref<80xf32, #tpu.memory_space<smem>>
    %c1_i32_52 = arith.constant 1 : i32
    %268 = arith.addi %252, %c1_i32_52 : i32
    %269 = arith.index_cast %268 : i32 to index
    %270 = memref.load %arg2[%269] : memref<80xf32, #tpu.memory_space<smem>>
    %271 = vector.broadcast %270 : f32 to vector<8x512xf32>
    %272 = arith.subf %5, %271 : vector<8x512xf32>
    %273 = math.absf %272 : vector<8x512xf32>
    %274 = vector.broadcast %267 : f32 to vector<8x512xf32>
    %275 = arith.mulf %274, %273 : vector<8x512xf32>
    %276 = arith.addf %227, %275 : vector<8x512xf32>
    %c2_i32_53 = arith.constant 2 : i32
    %277 = arith.addi %252, %c2_i32_53 : i32
    %278 = arith.index_cast %277 : i32 to index
    %279 = memref.load %arg3[%278] : memref<80xf32, #tpu.memory_space<smem>>
    %c2_i32_54 = arith.constant 2 : i32
    %280 = arith.addi %252, %c2_i32_54 : i32
    %281 = arith.index_cast %280 : i32 to index
    %282 = memref.load %arg2[%281] : memref<80xf32, #tpu.memory_space<smem>>
    %283 = vector.broadcast %282 : f32 to vector<8x512xf32>
    %284 = arith.subf %5, %283 : vector<8x512xf32>
    %285 = math.absf %284 : vector<8x512xf32>
    %286 = vector.broadcast %279 : f32 to vector<8x512xf32>
    %287 = arith.mulf %286, %285 : vector<8x512xf32>
    %288 = arith.addf %239, %287 : vector<8x512xf32>
    %c3_i32_55 = arith.constant 3 : i32
    %289 = arith.addi %252, %c3_i32_55 : i32
    %290 = arith.index_cast %289 : i32 to index
    %291 = memref.load %arg3[%290] : memref<80xf32, #tpu.memory_space<smem>>
    %c3_i32_56 = arith.constant 3 : i32
    %292 = arith.addi %252, %c3_i32_56 : i32
    %293 = arith.index_cast %292 : i32 to index
    %294 = memref.load %arg2[%293] : memref<80xf32, #tpu.memory_space<smem>>
    %295 = vector.broadcast %294 : f32 to vector<8x512xf32>
    %296 = arith.subf %5, %295 : vector<8x512xf32>
    %297 = math.absf %296 : vector<8x512xf32>
    %298 = vector.broadcast %291 : f32 to vector<8x512xf32>
    %299 = arith.mulf %298, %297 : vector<8x512xf32>
    %300 = arith.addf %251, %299 : vector<8x512xf32>
    %c6_i32 = arith.constant 6 : i32
    %c4_i32_57 = arith.constant 4 : i32
    %301 = arith.muli %c6_i32, %c4_i32_57 : i32
    %c0_i32_58 = arith.constant 0 : i32
    %302 = arith.addi %301, %c0_i32_58 : i32
    %303 = arith.index_cast %302 : i32 to index
    %304 = memref.load %arg3[%303] : memref<80xf32, #tpu.memory_space<smem>>
    %c0_i32_59 = arith.constant 0 : i32
    %305 = arith.addi %301, %c0_i32_59 : i32
    %306 = arith.index_cast %305 : i32 to index
    %307 = memref.load %arg2[%306] : memref<80xf32, #tpu.memory_space<smem>>
    %308 = vector.broadcast %307 : f32 to vector<8x512xf32>
    %309 = arith.subf %5, %308 : vector<8x512xf32>
    %310 = math.absf %309 : vector<8x512xf32>
    %311 = vector.broadcast %304 : f32 to vector<8x512xf32>
    %312 = arith.mulf %311, %310 : vector<8x512xf32>
    %313 = arith.addf %264, %312 : vector<8x512xf32>
    %c1_i32_60 = arith.constant 1 : i32
    %314 = arith.addi %301, %c1_i32_60 : i32
    %315 = arith.index_cast %314 : i32 to index
    %316 = memref.load %arg3[%315] : memref<80xf32, #tpu.memory_space<smem>>
    %c1_i32_61 = arith.constant 1 : i32
    %317 = arith.addi %301, %c1_i32_61 : i32
    %318 = arith.index_cast %317 : i32 to index
    %319 = memref.load %arg2[%318] : memref<80xf32, #tpu.memory_space<smem>>
    %320 = vector.broadcast %319 : f32 to vector<8x512xf32>
    %321 = arith.subf %5, %320 : vector<8x512xf32>
    %322 = math.absf %321 : vector<8x512xf32>
    %323 = vector.broadcast %316 : f32 to vector<8x512xf32>
    %324 = arith.mulf %323, %322 : vector<8x512xf32>
    %325 = arith.addf %276, %324 : vector<8x512xf32>
    %c2_i32_62 = arith.constant 2 : i32
    %326 = arith.addi %301, %c2_i32_62 : i32
    %327 = arith.index_cast %326 : i32 to index
    %328 = memref.load %arg3[%327] : memref<80xf32, #tpu.memory_space<smem>>
    %c2_i32_63 = arith.constant 2 : i32
    %329 = arith.addi %301, %c2_i32_63 : i32
    %330 = arith.index_cast %329 : i32 to index
    %331 = memref.load %arg2[%330] : memref<80xf32, #tpu.memory_space<smem>>
    %332 = vector.broadcast %331 : f32 to vector<8x512xf32>
    %333 = arith.subf %5, %332 : vector<8x512xf32>
    %334 = math.absf %333 : vector<8x512xf32>
    %335 = vector.broadcast %328 : f32 to vector<8x512xf32>
    %336 = arith.mulf %335, %334 : vector<8x512xf32>
    %337 = arith.addf %288, %336 : vector<8x512xf32>
    %c3_i32_64 = arith.constant 3 : i32
    %338 = arith.addi %301, %c3_i32_64 : i32
    %339 = arith.index_cast %338 : i32 to index
    %340 = memref.load %arg3[%339] : memref<80xf32, #tpu.memory_space<smem>>
    %c3_i32_65 = arith.constant 3 : i32
    %341 = arith.addi %301, %c3_i32_65 : i32
    %342 = arith.index_cast %341 : i32 to index
    %343 = memref.load %arg2[%342] : memref<80xf32, #tpu.memory_space<smem>>
    %344 = vector.broadcast %343 : f32 to vector<8x512xf32>
    %345 = arith.subf %5, %344 : vector<8x512xf32>
    %346 = math.absf %345 : vector<8x512xf32>
    %347 = vector.broadcast %340 : f32 to vector<8x512xf32>
    %348 = arith.mulf %347, %346 : vector<8x512xf32>
    %349 = arith.addf %300, %348 : vector<8x512xf32>
    %c7_i32 = arith.constant 7 : i32
    %c4_i32_66 = arith.constant 4 : i32
    %350 = arith.muli %c7_i32, %c4_i32_66 : i32
    %c0_i32_67 = arith.constant 0 : i32
    %351 = arith.addi %350, %c0_i32_67 : i32
    %352 = arith.index_cast %351 : i32 to index
    %353 = memref.load %arg3[%352] : memref<80xf32, #tpu.memory_space<smem>>
    %c0_i32_68 = arith.constant 0 : i32
    %354 = arith.addi %350, %c0_i32_68 : i32
    %355 = arith.index_cast %354 : i32 to index
    %356 = memref.load %arg2[%355] : memref<80xf32, #tpu.memory_space<smem>>
    %357 = vector.broadcast %356 : f32 to vector<8x512xf32>
    %358 = arith.subf %5, %357 : vector<8x512xf32>
    %359 = math.absf %358 : vector<8x512xf32>
    %360 = vector.broadcast %353 : f32 to vector<8x512xf32>
    %361 = arith.mulf %360, %359 : vector<8x512xf32>
    %362 = arith.addf %313, %361 : vector<8x512xf32>
    %c1_i32_69 = arith.constant 1 : i32
    %363 = arith.addi %350, %c1_i32_69 : i32
    %364 = arith.index_cast %363 : i32 to index
    %365 = memref.load %arg3[%364] : memref<80xf32, #tpu.memory_space<smem>>
    %c1_i32_70 = arith.constant 1 : i32
    %366 = arith.addi %350, %c1_i32_70 : i32
    %367 = arith.index_cast %366 : i32 to index
    %368 = memref.load %arg2[%367] : memref<80xf32, #tpu.memory_space<smem>>
    %369 = vector.broadcast %368 : f32 to vector<8x512xf32>
    %370 = arith.subf %5, %369 : vector<8x512xf32>
    %371 = math.absf %370 : vector<8x512xf32>
    %372 = vector.broadcast %365 : f32 to vector<8x512xf32>
    %373 = arith.mulf %372, %371 : vector<8x512xf32>
    %374 = arith.addf %325, %373 : vector<8x512xf32>
    %c2_i32_71 = arith.constant 2 : i32
    %375 = arith.addi %350, %c2_i32_71 : i32
    %376 = arith.index_cast %375 : i32 to index
    %377 = memref.load %arg3[%376] : memref<80xf32, #tpu.memory_space<smem>>
    %c2_i32_72 = arith.constant 2 : i32
    %378 = arith.addi %350, %c2_i32_72 : i32
    %379 = arith.index_cast %378 : i32 to index
    %380 = memref.load %arg2[%379] : memref<80xf32, #tpu.memory_space<smem>>
    %381 = vector.broadcast %380 : f32 to vector<8x512xf32>
    %382 = arith.subf %5, %381 : vector<8x512xf32>
    %383 = math.absf %382 : vector<8x512xf32>
    %384 = vector.broadcast %377 : f32 to vector<8x512xf32>
    %385 = arith.mulf %384, %383 : vector<8x512xf32>
    %386 = arith.addf %337, %385 : vector<8x512xf32>
    %c3_i32_73 = arith.constant 3 : i32
    %387 = arith.addi %350, %c3_i32_73 : i32
    %388 = arith.index_cast %387 : i32 to index
    %389 = memref.load %arg3[%388] : memref<80xf32, #tpu.memory_space<smem>>
    %c3_i32_74 = arith.constant 3 : i32
    %390 = arith.addi %350, %c3_i32_74 : i32
    %391 = arith.index_cast %390 : i32 to index
    %392 = memref.load %arg2[%391] : memref<80xf32, #tpu.memory_space<smem>>
    %393 = vector.broadcast %392 : f32 to vector<8x512xf32>
    %394 = arith.subf %5, %393 : vector<8x512xf32>
    %395 = math.absf %394 : vector<8x512xf32>
    %396 = vector.broadcast %389 : f32 to vector<8x512xf32>
    %397 = arith.mulf %396, %395 : vector<8x512xf32>
    %398 = arith.addf %349, %397 : vector<8x512xf32>
    %c8_i32_75 = arith.constant 8 : i32
    %c4_i32_76 = arith.constant 4 : i32
    %399 = arith.muli %c8_i32_75, %c4_i32_76 : i32
    %c0_i32_77 = arith.constant 0 : i32
    %400 = arith.addi %399, %c0_i32_77 : i32
    %401 = arith.index_cast %400 : i32 to index
    %402 = memref.load %arg3[%401] : memref<80xf32, #tpu.memory_space<smem>>
    %c0_i32_78 = arith.constant 0 : i32
    %403 = arith.addi %399, %c0_i32_78 : i32
    %404 = arith.index_cast %403 : i32 to index
    %405 = memref.load %arg2[%404] : memref<80xf32, #tpu.memory_space<smem>>
    %406 = vector.broadcast %405 : f32 to vector<8x512xf32>
    %407 = arith.subf %5, %406 : vector<8x512xf32>
    %408 = math.absf %407 : vector<8x512xf32>
    %409 = vector.broadcast %402 : f32 to vector<8x512xf32>
    %410 = arith.mulf %409, %408 : vector<8x512xf32>
    %411 = arith.addf %362, %410 : vector<8x512xf32>
    %c1_i32_79 = arith.constant 1 : i32
    %412 = arith.addi %399, %c1_i32_79 : i32
    %413 = arith.index_cast %412 : i32 to index
    %414 = memref.load %arg3[%413] : memref<80xf32, #tpu.memory_space<smem>>
    %c1_i32_80 = arith.constant 1 : i32
    %415 = arith.addi %399, %c1_i32_80 : i32
    %416 = arith.index_cast %415 : i32 to index
    %417 = memref.load %arg2[%416] : memref<80xf32, #tpu.memory_space<smem>>
    %418 = vector.broadcast %417 : f32 to vector<8x512xf32>
    %419 = arith.subf %5, %418 : vector<8x512xf32>
    %420 = math.absf %419 : vector<8x512xf32>
    %421 = vector.broadcast %414 : f32 to vector<8x512xf32>
    %422 = arith.mulf %421, %420 : vector<8x512xf32>
    %423 = arith.addf %374, %422 : vector<8x512xf32>
    %c2_i32_81 = arith.constant 2 : i32
    %424 = arith.addi %399, %c2_i32_81 : i32
    %425 = arith.index_cast %424 : i32 to index
    %426 = memref.load %arg3[%425] : memref<80xf32, #tpu.memory_space<smem>>
    %c2_i32_82 = arith.constant 2 : i32
    %427 = arith.addi %399, %c2_i32_82 : i32
    %428 = arith.index_cast %427 : i32 to index
    %429 = memref.load %arg2[%428] : memref<80xf32, #tpu.memory_space<smem>>
    %430 = vector.broadcast %429 : f32 to vector<8x512xf32>
    %431 = arith.subf %5, %430 : vector<8x512xf32>
    %432 = math.absf %431 : vector<8x512xf32>
    %433 = vector.broadcast %426 : f32 to vector<8x512xf32>
    %434 = arith.mulf %433, %432 : vector<8x512xf32>
    %435 = arith.addf %386, %434 : vector<8x512xf32>
    %c3_i32_83 = arith.constant 3 : i32
    %436 = arith.addi %399, %c3_i32_83 : i32
    %437 = arith.index_cast %436 : i32 to index
    %438 = memref.load %arg3[%437] : memref<80xf32, #tpu.memory_space<smem>>
    %c3_i32_84 = arith.constant 3 : i32
    %439 = arith.addi %399, %c3_i32_84 : i32
    %440 = arith.index_cast %439 : i32 to index
    %441 = memref.load %arg2[%440] : memref<80xf32, #tpu.memory_space<smem>>
    %442 = vector.broadcast %441 : f32 to vector<8x512xf32>
    %443 = arith.subf %5, %442 : vector<8x512xf32>
    %444 = math.absf %443 : vector<8x512xf32>
    %445 = vector.broadcast %438 : f32 to vector<8x512xf32>
    %446 = arith.mulf %445, %444 : vector<8x512xf32>
    %447 = arith.addf %398, %446 : vector<8x512xf32>
    %c9_i32 = arith.constant 9 : i32
    %c4_i32_85 = arith.constant 4 : i32
    %448 = arith.muli %c9_i32, %c4_i32_85 : i32
    %c0_i32_86 = arith.constant 0 : i32
    %449 = arith.addi %448, %c0_i32_86 : i32
    %450 = arith.index_cast %449 : i32 to index
    %451 = memref.load %arg3[%450] : memref<80xf32, #tpu.memory_space<smem>>
    %c0_i32_87 = arith.constant 0 : i32
    %452 = arith.addi %448, %c0_i32_87 : i32
    %453 = arith.index_cast %452 : i32 to index
    %454 = memref.load %arg2[%453] : memref<80xf32, #tpu.memory_space<smem>>
    %455 = vector.broadcast %454 : f32 to vector<8x512xf32>
    %456 = arith.subf %5, %455 : vector<8x512xf32>
    %457 = math.absf %456 : vector<8x512xf32>
    %458 = vector.broadcast %451 : f32 to vector<8x512xf32>
    %459 = arith.mulf %458, %457 : vector<8x512xf32>
    %460 = arith.addf %411, %459 : vector<8x512xf32>
    %c1_i32_88 = arith.constant 1 : i32
    %461 = arith.addi %448, %c1_i32_88 : i32
    %462 = arith.index_cast %461 : i32 to index
    %463 = memref.load %arg3[%462] : memref<80xf32, #tpu.memory_space<smem>>
    %c1_i32_89 = arith.constant 1 : i32
    %464 = arith.addi %448, %c1_i32_89 : i32
    %465 = arith.index_cast %464 : i32 to index
    %466 = memref.load %arg2[%465] : memref<80xf32, #tpu.memory_space<smem>>
    %467 = vector.broadcast %466 : f32 to vector<8x512xf32>
    %468 = arith.subf %5, %467 : vector<8x512xf32>
    %469 = math.absf %468 : vector<8x512xf32>
    %470 = vector.broadcast %463 : f32 to vector<8x512xf32>
    %471 = arith.mulf %470, %469 : vector<8x512xf32>
    %472 = arith.addf %423, %471 : vector<8x512xf32>
    %c2_i32_90 = arith.constant 2 : i32
    %473 = arith.addi %448, %c2_i32_90 : i32
    %474 = arith.index_cast %473 : i32 to index
    %475 = memref.load %arg3[%474] : memref<80xf32, #tpu.memory_space<smem>>
    %c2_i32_91 = arith.constant 2 : i32
    %476 = arith.addi %448, %c2_i32_91 : i32
    %477 = arith.index_cast %476 : i32 to index
    %478 = memref.load %arg2[%477] : memref<80xf32, #tpu.memory_space<smem>>
    %479 = vector.broadcast %478 : f32 to vector<8x512xf32>
    %480 = arith.subf %5, %479 : vector<8x512xf32>
    %481 = math.absf %480 : vector<8x512xf32>
    %482 = vector.broadcast %475 : f32 to vector<8x512xf32>
    %483 = arith.mulf %482, %481 : vector<8x512xf32>
    %484 = arith.addf %435, %483 : vector<8x512xf32>
    %c3_i32_92 = arith.constant 3 : i32
    %485 = arith.addi %448, %c3_i32_92 : i32
    %486 = arith.index_cast %485 : i32 to index
    %487 = memref.load %arg3[%486] : memref<80xf32, #tpu.memory_space<smem>>
    %c3_i32_93 = arith.constant 3 : i32
    %488 = arith.addi %448, %c3_i32_93 : i32
    %489 = arith.index_cast %488 : i32 to index
    %490 = memref.load %arg2[%489] : memref<80xf32, #tpu.memory_space<smem>>
    %491 = vector.broadcast %490 : f32 to vector<8x512xf32>
    %492 = arith.subf %5, %491 : vector<8x512xf32>
    %493 = math.absf %492 : vector<8x512xf32>
    %494 = vector.broadcast %487 : f32 to vector<8x512xf32>
    %495 = arith.mulf %494, %493 : vector<8x512xf32>
    %496 = arith.addf %447, %495 : vector<8x512xf32>
    %c10_i32 = arith.constant 10 : i32
    %c4_i32_94 = arith.constant 4 : i32
    %497 = arith.muli %c10_i32, %c4_i32_94 : i32
    %c0_i32_95 = arith.constant 0 : i32
    %498 = arith.addi %497, %c0_i32_95 : i32
    %499 = arith.index_cast %498 : i32 to index
    %500 = memref.load %arg3[%499] : memref<80xf32, #tpu.memory_space<smem>>
    %c0_i32_96 = arith.constant 0 : i32
    %501 = arith.addi %497, %c0_i32_96 : i32
    %502 = arith.index_cast %501 : i32 to index
    %503 = memref.load %arg2[%502] : memref<80xf32, #tpu.memory_space<smem>>
    %504 = vector.broadcast %503 : f32 to vector<8x512xf32>
    %505 = arith.subf %5, %504 : vector<8x512xf32>
    %506 = math.absf %505 : vector<8x512xf32>
    %507 = vector.broadcast %500 : f32 to vector<8x512xf32>
    %508 = arith.mulf %507, %506 : vector<8x512xf32>
    %509 = arith.addf %460, %508 : vector<8x512xf32>
    %c1_i32_97 = arith.constant 1 : i32
    %510 = arith.addi %497, %c1_i32_97 : i32
    %511 = arith.index_cast %510 : i32 to index
    %512 = memref.load %arg3[%511] : memref<80xf32, #tpu.memory_space<smem>>
    %c1_i32_98 = arith.constant 1 : i32
    %513 = arith.addi %497, %c1_i32_98 : i32
    %514 = arith.index_cast %513 : i32 to index
    %515 = memref.load %arg2[%514] : memref<80xf32, #tpu.memory_space<smem>>
    %516 = vector.broadcast %515 : f32 to vector<8x512xf32>
    %517 = arith.subf %5, %516 : vector<8x512xf32>
    %518 = math.absf %517 : vector<8x512xf32>
    %519 = vector.broadcast %512 : f32 to vector<8x512xf32>
    %520 = arith.mulf %519, %518 : vector<8x512xf32>
    %521 = arith.addf %472, %520 : vector<8x512xf32>
    %c2_i32_99 = arith.constant 2 : i32
    %522 = arith.addi %497, %c2_i32_99 : i32
    %523 = arith.index_cast %522 : i32 to index
    %524 = memref.load %arg3[%523] : memref<80xf32, #tpu.memory_space<smem>>
    %c2_i32_100 = arith.constant 2 : i32
    %525 = arith.addi %497, %c2_i32_100 : i32
    %526 = arith.index_cast %525 : i32 to index
    %527 = memref.load %arg2[%526] : memref<80xf32, #tpu.memory_space<smem>>
    %528 = vector.broadcast %527 : f32 to vector<8x512xf32>
    %529 = arith.subf %5, %528 : vector<8x512xf32>
    %530 = math.absf %529 : vector<8x512xf32>
    %531 = vector.broadcast %524 : f32 to vector<8x512xf32>
    %532 = arith.mulf %531, %530 : vector<8x512xf32>
    %533 = arith.addf %484, %532 : vector<8x512xf32>
    %c3_i32_101 = arith.constant 3 : i32
    %534 = arith.addi %497, %c3_i32_101 : i32
    %535 = arith.index_cast %534 : i32 to index
    %536 = memref.load %arg3[%535] : memref<80xf32, #tpu.memory_space<smem>>
    %c3_i32_102 = arith.constant 3 : i32
    %537 = arith.addi %497, %c3_i32_102 : i32
    %538 = arith.index_cast %537 : i32 to index
    %539 = memref.load %arg2[%538] : memref<80xf32, #tpu.memory_space<smem>>
    %540 = vector.broadcast %539 : f32 to vector<8x512xf32>
    %541 = arith.subf %5, %540 : vector<8x512xf32>
    %542 = math.absf %541 : vector<8x512xf32>
    %543 = vector.broadcast %536 : f32 to vector<8x512xf32>
    %544 = arith.mulf %543, %542 : vector<8x512xf32>
    %545 = arith.addf %496, %544 : vector<8x512xf32>
    %c11_i32 = arith.constant 11 : i32
    %c4_i32_103 = arith.constant 4 : i32
    %546 = arith.muli %c11_i32, %c4_i32_103 : i32
    %c0_i32_104 = arith.constant 0 : i32
    %547 = arith.addi %546, %c0_i32_104 : i32
    %548 = arith.index_cast %547 : i32 to index
    %549 = memref.load %arg3[%548] : memref<80xf32, #tpu.memory_space<smem>>
    %c0_i32_105 = arith.constant 0 : i32
    %550 = arith.addi %546, %c0_i32_105 : i32
    %551 = arith.index_cast %550 : i32 to index
    %552 = memref.load %arg2[%551] : memref<80xf32, #tpu.memory_space<smem>>
    %553 = vector.broadcast %552 : f32 to vector<8x512xf32>
    %554 = arith.subf %5, %553 : vector<8x512xf32>
    %555 = math.absf %554 : vector<8x512xf32>
    %556 = vector.broadcast %549 : f32 to vector<8x512xf32>
    %557 = arith.mulf %556, %555 : vector<8x512xf32>
    %558 = arith.addf %509, %557 : vector<8x512xf32>
    %c1_i32_106 = arith.constant 1 : i32
    %559 = arith.addi %546, %c1_i32_106 : i32
    %560 = arith.index_cast %559 : i32 to index
    %561 = memref.load %arg3[%560] : memref<80xf32, #tpu.memory_space<smem>>
    %c1_i32_107 = arith.constant 1 : i32
    %562 = arith.addi %546, %c1_i32_107 : i32
    %563 = arith.index_cast %562 : i32 to index
    %564 = memref.load %arg2[%563] : memref<80xf32, #tpu.memory_space<smem>>
    %565 = vector.broadcast %564 : f32 to vector<8x512xf32>
    %566 = arith.subf %5, %565 : vector<8x512xf32>
    %567 = math.absf %566 : vector<8x512xf32>
    %568 = vector.broadcast %561 : f32 to vector<8x512xf32>
    %569 = arith.mulf %568, %567 : vector<8x512xf32>
    %570 = arith.addf %521, %569 : vector<8x512xf32>
    %c2_i32_108 = arith.constant 2 : i32
    %571 = arith.addi %546, %c2_i32_108 : i32
    %572 = arith.index_cast %571 : i32 to index
    %573 = memref.load %arg3[%572] : memref<80xf32, #tpu.memory_space<smem>>
    %c2_i32_109 = arith.constant 2 : i32
    %574 = arith.addi %546, %c2_i32_109 : i32
    %575 = arith.index_cast %574 : i32 to index
    %576 = memref.load %arg2[%575] : memref<80xf32, #tpu.memory_space<smem>>
    %577 = vector.broadcast %576 : f32 to vector<8x512xf32>
    %578 = arith.subf %5, %577 : vector<8x512xf32>
    %579 = math.absf %578 : vector<8x512xf32>
    %580 = vector.broadcast %573 : f32 to vector<8x512xf32>
    %581 = arith.mulf %580, %579 : vector<8x512xf32>
    %582 = arith.addf %533, %581 : vector<8x512xf32>
    %c3_i32_110 = arith.constant 3 : i32
    %583 = arith.addi %546, %c3_i32_110 : i32
    %584 = arith.index_cast %583 : i32 to index
    %585 = memref.load %arg3[%584] : memref<80xf32, #tpu.memory_space<smem>>
    %c3_i32_111 = arith.constant 3 : i32
    %586 = arith.addi %546, %c3_i32_111 : i32
    %587 = arith.index_cast %586 : i32 to index
    %588 = memref.load %arg2[%587] : memref<80xf32, #tpu.memory_space<smem>>
    %589 = vector.broadcast %588 : f32 to vector<8x512xf32>
    %590 = arith.subf %5, %589 : vector<8x512xf32>
    %591 = math.absf %590 : vector<8x512xf32>
    %592 = vector.broadcast %585 : f32 to vector<8x512xf32>
    %593 = arith.mulf %592, %591 : vector<8x512xf32>
    %594 = arith.addf %545, %593 : vector<8x512xf32>
    %c12_i32 = arith.constant 12 : i32
    %c4_i32_112 = arith.constant 4 : i32
    %595 = arith.muli %c12_i32, %c4_i32_112 : i32
    %c0_i32_113 = arith.constant 0 : i32
    %596 = arith.addi %595, %c0_i32_113 : i32
    %597 = arith.index_cast %596 : i32 to index
    %598 = memref.load %arg3[%597] : memref<80xf32, #tpu.memory_space<smem>>
    %c0_i32_114 = arith.constant 0 : i32
    %599 = arith.addi %595, %c0_i32_114 : i32
    %600 = arith.index_cast %599 : i32 to index
    %601 = memref.load %arg2[%600] : memref<80xf32, #tpu.memory_space<smem>>
    %602 = vector.broadcast %601 : f32 to vector<8x512xf32>
    %603 = arith.subf %5, %602 : vector<8x512xf32>
    %604 = math.absf %603 : vector<8x512xf32>
    %605 = vector.broadcast %598 : f32 to vector<8x512xf32>
    %606 = arith.mulf %605, %604 : vector<8x512xf32>
    %607 = arith.addf %558, %606 : vector<8x512xf32>
    %c1_i32_115 = arith.constant 1 : i32
    %608 = arith.addi %595, %c1_i32_115 : i32
    %609 = arith.index_cast %608 : i32 to index
    %610 = memref.load %arg3[%609] : memref<80xf32, #tpu.memory_space<smem>>
    %c1_i32_116 = arith.constant 1 : i32
    %611 = arith.addi %595, %c1_i32_116 : i32
    %612 = arith.index_cast %611 : i32 to index
    %613 = memref.load %arg2[%612] : memref<80xf32, #tpu.memory_space<smem>>
    %614 = vector.broadcast %613 : f32 to vector<8x512xf32>
    %615 = arith.subf %5, %614 : vector<8x512xf32>
    %616 = math.absf %615 : vector<8x512xf32>
    %617 = vector.broadcast %610 : f32 to vector<8x512xf32>
    %618 = arith.mulf %617, %616 : vector<8x512xf32>
    %619 = arith.addf %570, %618 : vector<8x512xf32>
    %c2_i32_117 = arith.constant 2 : i32
    %620 = arith.addi %595, %c2_i32_117 : i32
    %621 = arith.index_cast %620 : i32 to index
    %622 = memref.load %arg3[%621] : memref<80xf32, #tpu.memory_space<smem>>
    %c2_i32_118 = arith.constant 2 : i32
    %623 = arith.addi %595, %c2_i32_118 : i32
    %624 = arith.index_cast %623 : i32 to index
    %625 = memref.load %arg2[%624] : memref<80xf32, #tpu.memory_space<smem>>
    %626 = vector.broadcast %625 : f32 to vector<8x512xf32>
    %627 = arith.subf %5, %626 : vector<8x512xf32>
    %628 = math.absf %627 : vector<8x512xf32>
    %629 = vector.broadcast %622 : f32 to vector<8x512xf32>
    %630 = arith.mulf %629, %628 : vector<8x512xf32>
    %631 = arith.addf %582, %630 : vector<8x512xf32>
    %c3_i32_119 = arith.constant 3 : i32
    %632 = arith.addi %595, %c3_i32_119 : i32
    %633 = arith.index_cast %632 : i32 to index
    %634 = memref.load %arg3[%633] : memref<80xf32, #tpu.memory_space<smem>>
    %c3_i32_120 = arith.constant 3 : i32
    %635 = arith.addi %595, %c3_i32_120 : i32
    %636 = arith.index_cast %635 : i32 to index
    %637 = memref.load %arg2[%636] : memref<80xf32, #tpu.memory_space<smem>>
    %638 = vector.broadcast %637 : f32 to vector<8x512xf32>
    %639 = arith.subf %5, %638 : vector<8x512xf32>
    %640 = math.absf %639 : vector<8x512xf32>
    %641 = vector.broadcast %634 : f32 to vector<8x512xf32>
    %642 = arith.mulf %641, %640 : vector<8x512xf32>
    %643 = arith.addf %594, %642 : vector<8x512xf32>
    %c13_i32 = arith.constant 13 : i32
    %c4_i32_121 = arith.constant 4 : i32
    %644 = arith.muli %c13_i32, %c4_i32_121 : i32
    %c0_i32_122 = arith.constant 0 : i32
    %645 = arith.addi %644, %c0_i32_122 : i32
    %646 = arith.index_cast %645 : i32 to index
    %647 = memref.load %arg3[%646] : memref<80xf32, #tpu.memory_space<smem>>
    %c0_i32_123 = arith.constant 0 : i32
    %648 = arith.addi %644, %c0_i32_123 : i32
    %649 = arith.index_cast %648 : i32 to index
    %650 = memref.load %arg2[%649] : memref<80xf32, #tpu.memory_space<smem>>
    %651 = vector.broadcast %650 : f32 to vector<8x512xf32>
    %652 = arith.subf %5, %651 : vector<8x512xf32>
    %653 = math.absf %652 : vector<8x512xf32>
    %654 = vector.broadcast %647 : f32 to vector<8x512xf32>
    %655 = arith.mulf %654, %653 : vector<8x512xf32>
    %656 = arith.addf %607, %655 : vector<8x512xf32>
    %c1_i32_124 = arith.constant 1 : i32
    %657 = arith.addi %644, %c1_i32_124 : i32
    %658 = arith.index_cast %657 : i32 to index
    %659 = memref.load %arg3[%658] : memref<80xf32, #tpu.memory_space<smem>>
    %c1_i32_125 = arith.constant 1 : i32
    %660 = arith.addi %644, %c1_i32_125 : i32
    %661 = arith.index_cast %660 : i32 to index
    %662 = memref.load %arg2[%661] : memref<80xf32, #tpu.memory_space<smem>>
    %663 = vector.broadcast %662 : f32 to vector<8x512xf32>
    %664 = arith.subf %5, %663 : vector<8x512xf32>
    %665 = math.absf %664 : vector<8x512xf32>
    %666 = vector.broadcast %659 : f32 to vector<8x512xf32>
    %667 = arith.mulf %666, %665 : vector<8x512xf32>
    %668 = arith.addf %619, %667 : vector<8x512xf32>
    %c2_i32_126 = arith.constant 2 : i32
    %669 = arith.addi %644, %c2_i32_126 : i32
    %670 = arith.index_cast %669 : i32 to index
    %671 = memref.load %arg3[%670] : memref<80xf32, #tpu.memory_space<smem>>
    %c2_i32_127 = arith.constant 2 : i32
    %672 = arith.addi %644, %c2_i32_127 : i32
    %673 = arith.index_cast %672 : i32 to index
    %674 = memref.load %arg2[%673] : memref<80xf32, #tpu.memory_space<smem>>
    %675 = vector.broadcast %674 : f32 to vector<8x512xf32>
    %676 = arith.subf %5, %675 : vector<8x512xf32>
    %677 = math.absf %676 : vector<8x512xf32>
    %678 = vector.broadcast %671 : f32 to vector<8x512xf32>
    %679 = arith.mulf %678, %677 : vector<8x512xf32>
    %680 = arith.addf %631, %679 : vector<8x512xf32>
    %c3_i32_128 = arith.constant 3 : i32
    %681 = arith.addi %644, %c3_i32_128 : i32
    %682 = arith.index_cast %681 : i32 to index
    %683 = memref.load %arg3[%682] : memref<80xf32, #tpu.memory_space<smem>>
    %c3_i32_129 = arith.constant 3 : i32
    %684 = arith.addi %644, %c3_i32_129 : i32
    %685 = arith.index_cast %684 : i32 to index
    %686 = memref.load %arg2[%685] : memref<80xf32, #tpu.memory_space<smem>>
    %687 = vector.broadcast %686 : f32 to vector<8x512xf32>
    %688 = arith.subf %5, %687 : vector<8x512xf32>
    %689 = math.absf %688 : vector<8x512xf32>
    %690 = vector.broadcast %683 : f32 to vector<8x512xf32>
    %691 = arith.mulf %690, %689 : vector<8x512xf32>
    %692 = arith.addf %643, %691 : vector<8x512xf32>
    %c14_i32 = arith.constant 14 : i32
    %c4_i32_130 = arith.constant 4 : i32
    %693 = arith.muli %c14_i32, %c4_i32_130 : i32
    %c0_i32_131 = arith.constant 0 : i32
    %694 = arith.addi %693, %c0_i32_131 : i32
    %695 = arith.index_cast %694 : i32 to index
    %696 = memref.load %arg3[%695] : memref<80xf32, #tpu.memory_space<smem>>
    %c0_i32_132 = arith.constant 0 : i32
    %697 = arith.addi %693, %c0_i32_132 : i32
    %698 = arith.index_cast %697 : i32 to index
    %699 = memref.load %arg2[%698] : memref<80xf32, #tpu.memory_space<smem>>
    %700 = vector.broadcast %699 : f32 to vector<8x512xf32>
    %701 = arith.subf %5, %700 : vector<8x512xf32>
    %702 = math.absf %701 : vector<8x512xf32>
    %703 = vector.broadcast %696 : f32 to vector<8x512xf32>
    %704 = arith.mulf %703, %702 : vector<8x512xf32>
    %705 = arith.addf %656, %704 : vector<8x512xf32>
    %c1_i32_133 = arith.constant 1 : i32
    %706 = arith.addi %693, %c1_i32_133 : i32
    %707 = arith.index_cast %706 : i32 to index
    %708 = memref.load %arg3[%707] : memref<80xf32, #tpu.memory_space<smem>>
    %c1_i32_134 = arith.constant 1 : i32
    %709 = arith.addi %693, %c1_i32_134 : i32
    %710 = arith.index_cast %709 : i32 to index
    %711 = memref.load %arg2[%710] : memref<80xf32, #tpu.memory_space<smem>>
    %712 = vector.broadcast %711 : f32 to vector<8x512xf32>
    %713 = arith.subf %5, %712 : vector<8x512xf32>
    %714 = math.absf %713 : vector<8x512xf32>
    %715 = vector.broadcast %708 : f32 to vector<8x512xf32>
    %716 = arith.mulf %715, %714 : vector<8x512xf32>
    %717 = arith.addf %668, %716 : vector<8x512xf32>
    %c2_i32_135 = arith.constant 2 : i32
    %718 = arith.addi %693, %c2_i32_135 : i32
    %719 = arith.index_cast %718 : i32 to index
    %720 = memref.load %arg3[%719] : memref<80xf32, #tpu.memory_space<smem>>
    %c2_i32_136 = arith.constant 2 : i32
    %721 = arith.addi %693, %c2_i32_136 : i32
    %722 = arith.index_cast %721 : i32 to index
    %723 = memref.load %arg2[%722] : memref<80xf32, #tpu.memory_space<smem>>
    %724 = vector.broadcast %723 : f32 to vector<8x512xf32>
    %725 = arith.subf %5, %724 : vector<8x512xf32>
    %726 = math.absf %725 : vector<8x512xf32>
    %727 = vector.broadcast %720 : f32 to vector<8x512xf32>
    %728 = arith.mulf %727, %726 : vector<8x512xf32>
    %729 = arith.addf %680, %728 : vector<8x512xf32>
    %c3_i32_137 = arith.constant 3 : i32
    %730 = arith.addi %693, %c3_i32_137 : i32
    %731 = arith.index_cast %730 : i32 to index
    %732 = memref.load %arg3[%731] : memref<80xf32, #tpu.memory_space<smem>>
    %c3_i32_138 = arith.constant 3 : i32
    %733 = arith.addi %693, %c3_i32_138 : i32
    %734 = arith.index_cast %733 : i32 to index
    %735 = memref.load %arg2[%734] : memref<80xf32, #tpu.memory_space<smem>>
    %736 = vector.broadcast %735 : f32 to vector<8x512xf32>
    %737 = arith.subf %5, %736 : vector<8x512xf32>
    %738 = math.absf %737 : vector<8x512xf32>
    %739 = vector.broadcast %732 : f32 to vector<8x512xf32>
    %740 = arith.mulf %739, %738 : vector<8x512xf32>
    %741 = arith.addf %692, %740 : vector<8x512xf32>
    %c15_i32 = arith.constant 15 : i32
    %c4_i32_139 = arith.constant 4 : i32
    %742 = arith.muli %c15_i32, %c4_i32_139 : i32
    %c0_i32_140 = arith.constant 0 : i32
    %743 = arith.addi %742, %c0_i32_140 : i32
    %744 = arith.index_cast %743 : i32 to index
    %745 = memref.load %arg3[%744] : memref<80xf32, #tpu.memory_space<smem>>
    %c0_i32_141 = arith.constant 0 : i32
    %746 = arith.addi %742, %c0_i32_141 : i32
    %747 = arith.index_cast %746 : i32 to index
    %748 = memref.load %arg2[%747] : memref<80xf32, #tpu.memory_space<smem>>
    %749 = vector.broadcast %748 : f32 to vector<8x512xf32>
    %750 = arith.subf %5, %749 : vector<8x512xf32>
    %751 = math.absf %750 : vector<8x512xf32>
    %752 = vector.broadcast %745 : f32 to vector<8x512xf32>
    %753 = arith.mulf %752, %751 : vector<8x512xf32>
    %754 = arith.addf %705, %753 : vector<8x512xf32>
    %c1_i32_142 = arith.constant 1 : i32
    %755 = arith.addi %742, %c1_i32_142 : i32
    %756 = arith.index_cast %755 : i32 to index
    %757 = memref.load %arg3[%756] : memref<80xf32, #tpu.memory_space<smem>>
    %c1_i32_143 = arith.constant 1 : i32
    %758 = arith.addi %742, %c1_i32_143 : i32
    %759 = arith.index_cast %758 : i32 to index
    %760 = memref.load %arg2[%759] : memref<80xf32, #tpu.memory_space<smem>>
    %761 = vector.broadcast %760 : f32 to vector<8x512xf32>
    %762 = arith.subf %5, %761 : vector<8x512xf32>
    %763 = math.absf %762 : vector<8x512xf32>
    %764 = vector.broadcast %757 : f32 to vector<8x512xf32>
    %765 = arith.mulf %764, %763 : vector<8x512xf32>
    %766 = arith.addf %717, %765 : vector<8x512xf32>
    %c2_i32_144 = arith.constant 2 : i32
    %767 = arith.addi %742, %c2_i32_144 : i32
    %768 = arith.index_cast %767 : i32 to index
    %769 = memref.load %arg3[%768] : memref<80xf32, #tpu.memory_space<smem>>
    %c2_i32_145 = arith.constant 2 : i32
    %770 = arith.addi %742, %c2_i32_145 : i32
    %771 = arith.index_cast %770 : i32 to index
    %772 = memref.load %arg2[%771] : memref<80xf32, #tpu.memory_space<smem>>
    %773 = vector.broadcast %772 : f32 to vector<8x512xf32>
    %774 = arith.subf %5, %773 : vector<8x512xf32>
    %775 = math.absf %774 : vector<8x512xf32>
    %776 = vector.broadcast %769 : f32 to vector<8x512xf32>
    %777 = arith.mulf %776, %775 : vector<8x512xf32>
    %778 = arith.addf %729, %777 : vector<8x512xf32>
    %c3_i32_146 = arith.constant 3 : i32
    %779 = arith.addi %742, %c3_i32_146 : i32
    %780 = arith.index_cast %779 : i32 to index
    %781 = memref.load %arg3[%780] : memref<80xf32, #tpu.memory_space<smem>>
    %c3_i32_147 = arith.constant 3 : i32
    %782 = arith.addi %742, %c3_i32_147 : i32
    %783 = arith.index_cast %782 : i32 to index
    %784 = memref.load %arg2[%783] : memref<80xf32, #tpu.memory_space<smem>>
    %785 = vector.broadcast %784 : f32 to vector<8x512xf32>
    %786 = arith.subf %5, %785 : vector<8x512xf32>
    %787 = math.absf %786 : vector<8x512xf32>
    %788 = vector.broadcast %781 : f32 to vector<8x512xf32>
    %789 = arith.mulf %788, %787 : vector<8x512xf32>
    %790 = arith.addf %741, %789 : vector<8x512xf32>
    %c16_i32 = arith.constant 16 : i32
    %c4_i32_148 = arith.constant 4 : i32
    %791 = arith.muli %c16_i32, %c4_i32_148 : i32
    %c0_i32_149 = arith.constant 0 : i32
    %792 = arith.addi %791, %c0_i32_149 : i32
    %793 = arith.index_cast %792 : i32 to index
    %794 = memref.load %arg3[%793] : memref<80xf32, #tpu.memory_space<smem>>
    %c0_i32_150 = arith.constant 0 : i32
    %795 = arith.addi %791, %c0_i32_150 : i32
    %796 = arith.index_cast %795 : i32 to index
    %797 = memref.load %arg2[%796] : memref<80xf32, #tpu.memory_space<smem>>
    %798 = vector.broadcast %797 : f32 to vector<8x512xf32>
    %799 = arith.subf %5, %798 : vector<8x512xf32>
    %800 = math.absf %799 : vector<8x512xf32>
    %801 = vector.broadcast %794 : f32 to vector<8x512xf32>
    %802 = arith.mulf %801, %800 : vector<8x512xf32>
    %803 = arith.addf %754, %802 : vector<8x512xf32>
    %c1_i32_151 = arith.constant 1 : i32
    %804 = arith.addi %791, %c1_i32_151 : i32
    %805 = arith.index_cast %804 : i32 to index
    %806 = memref.load %arg3[%805] : memref<80xf32, #tpu.memory_space<smem>>
    %c1_i32_152 = arith.constant 1 : i32
    %807 = arith.addi %791, %c1_i32_152 : i32
    %808 = arith.index_cast %807 : i32 to index
    %809 = memref.load %arg2[%808] : memref<80xf32, #tpu.memory_space<smem>>
    %810 = vector.broadcast %809 : f32 to vector<8x512xf32>
    %811 = arith.subf %5, %810 : vector<8x512xf32>
    %812 = math.absf %811 : vector<8x512xf32>
    %813 = vector.broadcast %806 : f32 to vector<8x512xf32>
    %814 = arith.mulf %813, %812 : vector<8x512xf32>
    %815 = arith.addf %766, %814 : vector<8x512xf32>
    %c2_i32_153 = arith.constant 2 : i32
    %816 = arith.addi %791, %c2_i32_153 : i32
    %817 = arith.index_cast %816 : i32 to index
    %818 = memref.load %arg3[%817] : memref<80xf32, #tpu.memory_space<smem>>
    %c2_i32_154 = arith.constant 2 : i32
    %819 = arith.addi %791, %c2_i32_154 : i32
    %820 = arith.index_cast %819 : i32 to index
    %821 = memref.load %arg2[%820] : memref<80xf32, #tpu.memory_space<smem>>
    %822 = vector.broadcast %821 : f32 to vector<8x512xf32>
    %823 = arith.subf %5, %822 : vector<8x512xf32>
    %824 = math.absf %823 : vector<8x512xf32>
    %825 = vector.broadcast %818 : f32 to vector<8x512xf32>
    %826 = arith.mulf %825, %824 : vector<8x512xf32>
    %827 = arith.addf %778, %826 : vector<8x512xf32>
    %c3_i32_155 = arith.constant 3 : i32
    %828 = arith.addi %791, %c3_i32_155 : i32
    %829 = arith.index_cast %828 : i32 to index
    %830 = memref.load %arg3[%829] : memref<80xf32, #tpu.memory_space<smem>>
    %c3_i32_156 = arith.constant 3 : i32
    %831 = arith.addi %791, %c3_i32_156 : i32
    %832 = arith.index_cast %831 : i32 to index
    %833 = memref.load %arg2[%832] : memref<80xf32, #tpu.memory_space<smem>>
    %834 = vector.broadcast %833 : f32 to vector<8x512xf32>
    %835 = arith.subf %5, %834 : vector<8x512xf32>
    %836 = math.absf %835 : vector<8x512xf32>
    %837 = vector.broadcast %830 : f32 to vector<8x512xf32>
    %838 = arith.mulf %837, %836 : vector<8x512xf32>
    %839 = arith.addf %790, %838 : vector<8x512xf32>
    %c17_i32 = arith.constant 17 : i32
    %c4_i32_157 = arith.constant 4 : i32
    %840 = arith.muli %c17_i32, %c4_i32_157 : i32
    %c0_i32_158 = arith.constant 0 : i32
    %841 = arith.addi %840, %c0_i32_158 : i32
    %842 = arith.index_cast %841 : i32 to index
    %843 = memref.load %arg3[%842] : memref<80xf32, #tpu.memory_space<smem>>
    %c0_i32_159 = arith.constant 0 : i32
    %844 = arith.addi %840, %c0_i32_159 : i32
    %845 = arith.index_cast %844 : i32 to index
    %846 = memref.load %arg2[%845] : memref<80xf32, #tpu.memory_space<smem>>
    %847 = vector.broadcast %846 : f32 to vector<8x512xf32>
    %848 = arith.subf %5, %847 : vector<8x512xf32>
    %849 = math.absf %848 : vector<8x512xf32>
    %850 = vector.broadcast %843 : f32 to vector<8x512xf32>
    %851 = arith.mulf %850, %849 : vector<8x512xf32>
    %852 = arith.addf %803, %851 : vector<8x512xf32>
    %c1_i32_160 = arith.constant 1 : i32
    %853 = arith.addi %840, %c1_i32_160 : i32
    %854 = arith.index_cast %853 : i32 to index
    %855 = memref.load %arg3[%854] : memref<80xf32, #tpu.memory_space<smem>>
    %c1_i32_161 = arith.constant 1 : i32
    %856 = arith.addi %840, %c1_i32_161 : i32
    %857 = arith.index_cast %856 : i32 to index
    %858 = memref.load %arg2[%857] : memref<80xf32, #tpu.memory_space<smem>>
    %859 = vector.broadcast %858 : f32 to vector<8x512xf32>
    %860 = arith.subf %5, %859 : vector<8x512xf32>
    %861 = math.absf %860 : vector<8x512xf32>
    %862 = vector.broadcast %855 : f32 to vector<8x512xf32>
    %863 = arith.mulf %862, %861 : vector<8x512xf32>
    %864 = arith.addf %815, %863 : vector<8x512xf32>
    %c2_i32_162 = arith.constant 2 : i32
    %865 = arith.addi %840, %c2_i32_162 : i32
    %866 = arith.index_cast %865 : i32 to index
    %867 = memref.load %arg3[%866] : memref<80xf32, #tpu.memory_space<smem>>
    %c2_i32_163 = arith.constant 2 : i32
    %868 = arith.addi %840, %c2_i32_163 : i32
    %869 = arith.index_cast %868 : i32 to index
    %870 = memref.load %arg2[%869] : memref<80xf32, #tpu.memory_space<smem>>
    %871 = vector.broadcast %870 : f32 to vector<8x512xf32>
    %872 = arith.subf %5, %871 : vector<8x512xf32>
    %873 = math.absf %872 : vector<8x512xf32>
    %874 = vector.broadcast %867 : f32 to vector<8x512xf32>
    %875 = arith.mulf %874, %873 : vector<8x512xf32>
    %876 = arith.addf %827, %875 : vector<8x512xf32>
    %c3_i32_164 = arith.constant 3 : i32
    %877 = arith.addi %840, %c3_i32_164 : i32
    %878 = arith.index_cast %877 : i32 to index
    %879 = memref.load %arg3[%878] : memref<80xf32, #tpu.memory_space<smem>>
    %c3_i32_165 = arith.constant 3 : i32
    %880 = arith.addi %840, %c3_i32_165 : i32
    %881 = arith.index_cast %880 : i32 to index
    %882 = memref.load %arg2[%881] : memref<80xf32, #tpu.memory_space<smem>>
    %883 = vector.broadcast %882 : f32 to vector<8x512xf32>
    %884 = arith.subf %5, %883 : vector<8x512xf32>
    %885 = math.absf %884 : vector<8x512xf32>
    %886 = vector.broadcast %879 : f32 to vector<8x512xf32>
    %887 = arith.mulf %886, %885 : vector<8x512xf32>
    %888 = arith.addf %839, %887 : vector<8x512xf32>
    %c18_i32 = arith.constant 18 : i32
    %c4_i32_166 = arith.constant 4 : i32
    %889 = arith.muli %c18_i32, %c4_i32_166 : i32
    %c0_i32_167 = arith.constant 0 : i32
    %890 = arith.addi %889, %c0_i32_167 : i32
    %891 = arith.index_cast %890 : i32 to index
    %892 = memref.load %arg3[%891] : memref<80xf32, #tpu.memory_space<smem>>
    %c0_i32_168 = arith.constant 0 : i32
    %893 = arith.addi %889, %c0_i32_168 : i32
    %894 = arith.index_cast %893 : i32 to index
    %895 = memref.load %arg2[%894] : memref<80xf32, #tpu.memory_space<smem>>
    %896 = vector.broadcast %895 : f32 to vector<8x512xf32>
    %897 = arith.subf %5, %896 : vector<8x512xf32>
    %898 = math.absf %897 : vector<8x512xf32>
    %899 = vector.broadcast %892 : f32 to vector<8x512xf32>
    %900 = arith.mulf %899, %898 : vector<8x512xf32>
    %901 = arith.addf %852, %900 : vector<8x512xf32>
    %c1_i32_169 = arith.constant 1 : i32
    %902 = arith.addi %889, %c1_i32_169 : i32
    %903 = arith.index_cast %902 : i32 to index
    %904 = memref.load %arg3[%903] : memref<80xf32, #tpu.memory_space<smem>>
    %c1_i32_170 = arith.constant 1 : i32
    %905 = arith.addi %889, %c1_i32_170 : i32
    %906 = arith.index_cast %905 : i32 to index
    %907 = memref.load %arg2[%906] : memref<80xf32, #tpu.memory_space<smem>>
    %908 = vector.broadcast %907 : f32 to vector<8x512xf32>
    %909 = arith.subf %5, %908 : vector<8x512xf32>
    %910 = math.absf %909 : vector<8x512xf32>
    %911 = vector.broadcast %904 : f32 to vector<8x512xf32>
    %912 = arith.mulf %911, %910 : vector<8x512xf32>
    %913 = arith.addf %864, %912 : vector<8x512xf32>
    %c2_i32_171 = arith.constant 2 : i32
    %914 = arith.addi %889, %c2_i32_171 : i32
    %915 = arith.index_cast %914 : i32 to index
    %916 = memref.load %arg3[%915] : memref<80xf32, #tpu.memory_space<smem>>
    %c2_i32_172 = arith.constant 2 : i32
    %917 = arith.addi %889, %c2_i32_172 : i32
    %918 = arith.index_cast %917 : i32 to index
    %919 = memref.load %arg2[%918] : memref<80xf32, #tpu.memory_space<smem>>
    %920 = vector.broadcast %919 : f32 to vector<8x512xf32>
    %921 = arith.subf %5, %920 : vector<8x512xf32>
    %922 = math.absf %921 : vector<8x512xf32>
    %923 = vector.broadcast %916 : f32 to vector<8x512xf32>
    %924 = arith.mulf %923, %922 : vector<8x512xf32>
    %925 = arith.addf %876, %924 : vector<8x512xf32>
    %c3_i32_173 = arith.constant 3 : i32
    %926 = arith.addi %889, %c3_i32_173 : i32
    %927 = arith.index_cast %926 : i32 to index
    %928 = memref.load %arg3[%927] : memref<80xf32, #tpu.memory_space<smem>>
    %c3_i32_174 = arith.constant 3 : i32
    %929 = arith.addi %889, %c3_i32_174 : i32
    %930 = arith.index_cast %929 : i32 to index
    %931 = memref.load %arg2[%930] : memref<80xf32, #tpu.memory_space<smem>>
    %932 = vector.broadcast %931 : f32 to vector<8x512xf32>
    %933 = arith.subf %5, %932 : vector<8x512xf32>
    %934 = math.absf %933 : vector<8x512xf32>
    %935 = vector.broadcast %928 : f32 to vector<8x512xf32>
    %936 = arith.mulf %935, %934 : vector<8x512xf32>
    %937 = arith.addf %888, %936 : vector<8x512xf32>
    %c19_i32 = arith.constant 19 : i32
    %c4_i32_175 = arith.constant 4 : i32
    %938 = arith.muli %c19_i32, %c4_i32_175 : i32
    %c0_i32_176 = arith.constant 0 : i32
    %939 = arith.addi %938, %c0_i32_176 : i32
    %940 = arith.index_cast %939 : i32 to index
    %941 = memref.load %arg3[%940] : memref<80xf32, #tpu.memory_space<smem>>
    %c0_i32_177 = arith.constant 0 : i32
    %942 = arith.addi %938, %c0_i32_177 : i32
    %943 = arith.index_cast %942 : i32 to index
    %944 = memref.load %arg2[%943] : memref<80xf32, #tpu.memory_space<smem>>
    %945 = vector.broadcast %944 : f32 to vector<8x512xf32>
    %946 = arith.subf %5, %945 : vector<8x512xf32>
    %947 = math.absf %946 : vector<8x512xf32>
    %948 = vector.broadcast %941 : f32 to vector<8x512xf32>
    %949 = arith.mulf %948, %947 : vector<8x512xf32>
    %950 = arith.addf %901, %949 : vector<8x512xf32>
    %c1_i32_178 = arith.constant 1 : i32
    %951 = arith.addi %938, %c1_i32_178 : i32
    %952 = arith.index_cast %951 : i32 to index
    %953 = memref.load %arg3[%952] : memref<80xf32, #tpu.memory_space<smem>>
    %c1_i32_179 = arith.constant 1 : i32
    %954 = arith.addi %938, %c1_i32_179 : i32
    %955 = arith.index_cast %954 : i32 to index
    %956 = memref.load %arg2[%955] : memref<80xf32, #tpu.memory_space<smem>>
    %957 = vector.broadcast %956 : f32 to vector<8x512xf32>
    %958 = arith.subf %5, %957 : vector<8x512xf32>
    %959 = math.absf %958 : vector<8x512xf32>
    %960 = vector.broadcast %953 : f32 to vector<8x512xf32>
    %961 = arith.mulf %960, %959 : vector<8x512xf32>
    %962 = arith.addf %913, %961 : vector<8x512xf32>
    %c2_i32_180 = arith.constant 2 : i32
    %963 = arith.addi %938, %c2_i32_180 : i32
    %964 = arith.index_cast %963 : i32 to index
    %965 = memref.load %arg3[%964] : memref<80xf32, #tpu.memory_space<smem>>
    %c2_i32_181 = arith.constant 2 : i32
    %966 = arith.addi %938, %c2_i32_181 : i32
    %967 = arith.index_cast %966 : i32 to index
    %968 = memref.load %arg2[%967] : memref<80xf32, #tpu.memory_space<smem>>
    %969 = vector.broadcast %968 : f32 to vector<8x512xf32>
    %970 = arith.subf %5, %969 : vector<8x512xf32>
    %971 = math.absf %970 : vector<8x512xf32>
    %972 = vector.broadcast %965 : f32 to vector<8x512xf32>
    %973 = arith.mulf %972, %971 : vector<8x512xf32>
    %974 = arith.addf %925, %973 : vector<8x512xf32>
    %c3_i32_182 = arith.constant 3 : i32
    %975 = arith.addi %938, %c3_i32_182 : i32
    %976 = arith.index_cast %975 : i32 to index
    %977 = memref.load %arg3[%976] : memref<80xf32, #tpu.memory_space<smem>>
    %c3_i32_183 = arith.constant 3 : i32
    %978 = arith.addi %938, %c3_i32_183 : i32
    %979 = arith.index_cast %978 : i32 to index
    %980 = memref.load %arg2[%979] : memref<80xf32, #tpu.memory_space<smem>>
    %981 = vector.broadcast %980 : f32 to vector<8x512xf32>
    %982 = arith.subf %5, %981 : vector<8x512xf32>
    %983 = math.absf %982 : vector<8x512xf32>
    %984 = vector.broadcast %977 : f32 to vector<8x512xf32>
    %985 = arith.mulf %984, %983 : vector<8x512xf32>
    %986 = arith.addf %937, %985 : vector<8x512xf32>
    %c20_i32 = arith.constant 20 : i32
    %cst_184 = arith.constant 1.000000e-01 : f32
    %987 = vector.broadcast %cst_184 : f32 to vector<8x512xf32>
    %988 = arith.mulf %5, %987 : vector<8x512xf32>
    %989 = arith.mulf %988, %988 : vector<8x512xf32>
    %990 = arith.addf %950, %962 : vector<8x512xf32>
    %991 = arith.addf %974, %986 : vector<8x512xf32>
    %992 = arith.addf %990, %991 : vector<8x512xf32>
    %993 = arith.addf %989, %992 : vector<8x512xf32>
    %994 = arith.index_cast %3 : i32 to index
    %c0_185 = arith.constant 0 : index
    %995 = vector.load %arg4[%994, %c0_185] : memref<8x512xf32, #tpu.memory_space<vmem>>, vector<8x512xf32>
    tpu.vector_store %arg4[%994, %c0_185], %993 {strides = array<i32>} : memref<8x512xf32, #tpu.memory_space<vmem>>, vector<8x512xf32>,
    %c1_i32_186 = arith.constant 1 : i32
    return
  }
  func.func @transform_0(%arg0: i32) -> (i32, i32) {
    %c0_i32 = arith.constant 0 : i32
    %c0_i32_0 = arith.constant 0 : i32
    return %arg0, %c0_i32 : i32, i32
  }
  func.func @transform_1(%arg0: i32) -> i32 {
    %c0_i32 = arith.constant 0 : i32
    %c0_i32_0 = arith.constant 0 : i32
    return %c0_i32 : i32
  }
  func.func @transform_2(%arg0: i32) -> i32 {
    %c0_i32 = arith.constant 0 : i32
    %c0_i32_0 = arith.constant 0 : i32
    return %c0_i32 : i32
  }
  func.func @transform_3(%arg0: i32) -> (i32, i32) {
    %c0_i32 = arith.constant 0 : i32
    %c0_i32_0 = arith.constant 0 : i32
    return %arg0, %c0_i32 : i32, i32
  }
}

</mosaic_0001>

<llo_original>
// kernel: tpu_custom_call.1
$region0: #{tpu_custom_call.1}
  #allocation0 [shape = 'u32[]', space=smem, size = 0x4, offset = 0x4, fixed_abs, tag = 'smem constant byte address 0x4 - core index']
  #allocation1 [shape = 'u32[144,128]{1,0:T(1,128)}', space=vmem, size = 0x12000, scoped, tag = 'internal scratch']
  %s0 = inlined_call_operand.hbm [shape: f32[8,512], index: 0, kind: input, shape index: {}]
  %s1 = inlined_call_operand.vmem [shape: f32[80], index: 1, kind: input, shape index: {}]
  %s2 = inlined_call_operand.vmem [shape: f32[80], index: 2, kind: input, shape index: {}]
  %s3 = inlined_call_operand.hbm [shape: f32[8,512], index: 3, kind: output, shape index: {}]
  %s4 = sld [smem:[#allocation0]]
  $region34: #{tpu_custom_call.1} parent=0
    _
  %s6 = ssub.s32 1, %s4
  %s7 = scalar_select 0, %s6, %s4
  $region1: #{tpu_custom_call.1} parent=0
    #allocation2 [shape = 'u8[16384]{0}', space=vmem, size = 0x4000, scoped, tag = 'input window, operand 0, single buffered']
    #allocation3 [shape = 's32[1]{0}', space=sflag, size = 0x4, scoped, tag = 'scoped memory for tpu_custom_call.1']
    #allocation4 [shape = 's32[1]{0}', space=sflag, size = 0x4, scoped, tag = 'scoped memory for tpu_custom_call.1']
    #allocation5 [shape = 's32[1]{0}', space=sflag, size = 0x4, scoped, tag = 'scoped memory for tpu_custom_call.1']
    #allocation6 [shape = 'u8[512]{0}', space=smem, size = 0x200, scoped, tag = 'input window, operand 1, single buffered']
    #allocation7 [shape = 'u8[512]{0}', space=smem, size = 0x200, scoped, tag = 'input window, operand 2, single buffered']
    #allocation8 [shape = 's32[1]{0}', space=sflag, size = 0x4, scoped, tag = 'scoped memory for tpu_custom_call.1']
    #allocation9 [shape = 'u8[16384]{0}', space=vmem, size = 0x4000, scoped, tag = 'output window, operand 0, single buffered']
    %8 = vsyncpa [#allocation3], 0
    %9 = vsyncpa [#allocation5], 0
    %10 = vsyncpa [#allocation8], 0
    %11 = vsyncpa [#allocation4], 0
    // Predicated region
    $region2: #{tpu_custom_call.1} parent=1 // pred_check
      _
    $region3: #{tpu_custom_call.1} parent=1 // pred_check_branch
      %13 = sbr.rel (0) target = $region5
    $region4: #{tpu_custom_call.1} parent=1 // pred_region
      %s15 = ssub.s32 512, 512
      %16 = vsyncadd [#allocation3], %s15
      %s18 = sshll.u32 [#allocation2], 4
      %s19 = int_to_ptr.vmem [resolvable:$true] %s18
      %21 = dma.hbm_to_vmem [thread:$0]  %s0, 512, %s19, [#allocation3]
    $region5: #{tpu_custom_call.1} parent=1 // pred_fallthru
      _
    // Predicated region
    $region6: #{tpu_custom_call.1} parent=1 // pred_check
      _
    $region7: #{tpu_custom_call.1} parent=1 // pred_check_branch
      %23 = sbr.rel (0) target = $region9
    $region8: #{tpu_custom_call.1} parent=1 // pred_region
      %s25 = ssub.s32 16, 16
      %26 = vsyncadd [#allocation5], %s25
      %s28 = sshll.u32 %s1, 4
      %s29 = int_to_ptr.vmem [resolvable:$true] %s28
      %31 = dma.vmem_to_smem %s29, 16, [#allocation6], [#allocation5]
    $region9: #{tpu_custom_call.1} parent=1 // pred_fallthru
      _
    // Predicated region
    $region10: #{tpu_custom_call.1} parent=1 // pred_check
      _
    $region11: #{tpu_custom_call.1} parent=1 // pred_check_branch
      %33 = sbr.rel (0) target = $region13
    $region12: #{tpu_custom_call.1} parent=1 // pred_region
      %s35 = ssub.s32 16, 16
      %36 = vsyncadd [#allocation8], %s35
      %s38 = sshll.u32 %s2, 4
      %s39 = int_to_ptr.vmem [resolvable:$true] %s38
      %41 = dma.vmem_to_smem %s39, 16, [#allocation7], [#allocation8]
    $region13: #{tpu_custom_call.1} parent=1 // pred_fallthru
      _
    // Predicated region
    $region14: #{tpu_custom_call.1} parent=1 // pred_check
      _
    $region15: #{tpu_custom_call.1} parent=1 // pred_check_branch
      %43 = sbr.rel (0) target = $region17
    $region16: #{tpu_custom_call.1} parent=1 // pred_region
      %44 = dma.done [#allocation3], 512
    $region17: #{tpu_custom_call.1} parent=1 // pred_fallthru
      _
    // Predicated region
    $region18: #{tpu_custom_call.1} parent=1 // pred_check
      _
    $region19: #{tpu_custom_call.1} parent=1 // pred_check_branch
      %46 = sbr.rel (0) target = $region21
    $region20: #{tpu_custom_call.1} parent=1 // pred_region
      %47 = dma.done [#allocation5], 16
    $region21: #{tpu_custom_call.1} parent=1 // pred_fallthru
      _
    // Predicated region
    $region22: #{tpu_custom_call.1} parent=1 // pred_check
      _
    $region23: #{tpu_custom_call.1} parent=1 // pred_check_branch
      %49 = sbr.rel (0) target = $region25
    $region24: #{tpu_custom_call.1} parent=1 // pred_region
      %50 = dma.done [#allocation8], 16
    $region25: #{tpu_custom_call.1} parent=1 // pred_fallthru
      _
    %51 = sfence
    %s52 = smul.u32 0, 4
    %s53 = smul.addr %s52, 8
    %s54 = scalar_lea.vmem [#allocation2], %s53
    %v55 = vld [vmem:[%s54] sm:$0xff]
    %v56 = vld [vmem:[%s54 + $0x8] sm:$0xff]
    %v57 = vld [vmem:[%s54 + $0x10] sm:$0xff]
    %v58 = vld [vmem:[%s54 + $0x18] sm:$0xff]
    %s59 = sld [smem:[#allocation7]]
    %s60 = sld [smem:[#allocation6]]
    %v61 = vstv %s60
    %v62 = vsub.f32 %v55, %v61
    %v63 = vsub.f32 %v56, %v61
    %v64 = vsub.f32 %v57, %v61
    %v65 = vsub.f32 %v58, %v61
    %v66 = vand.u32 2147483647, %v62
    %v67 = vand.u32 2147483647, %v63
    %v68 = vand.u32 2147483647, %v64
    %v69 = vand.u32 2147483647, %v65
    %v70 = vstv %s59
    %v71 = vmul.f32 %v70, %v66
    %v72 = vmul.f32 %v70, %v67
    %v73 = vmul.f32 %v70, %v68
    %v74 = vmul.f32 %v70, %v69
    %v75 = vadd.f32 %v71, 0.0
    %v76 = vadd.f32 %v72, 0.0
    %v77 = vadd.f32 %v73, 0.0
    %v78 = vadd.f32 %v74, 0.0
    %s79 = sld [smem:[#allocation7 + $0x1]]
    %s80 = sld [smem:[#allocation6 + $0x1]]
    %v81 = vstv %s80
    %v82 = vsub.f32 %v55, %v81
    %v83 = vsub.f32 %v56, %v81
    %v84 = vsub.f32 %v57, %v81
    %v85 = vsub.f32 %v58, %v81
    %v86 = vand.u32 2147483647, %v82
    %v87 = vand.u32 2147483647, %v83
    %v88 = vand.u32 2147483647, %v84
    %v89 = vand.u32 2147483647, %v85
    %v90 = vstv %s79
    %v91 = vmul.f32 %v90, %v86
    %v92 = vmul.f32 %v90, %v87
    %v93 = vmul.f32 %v90, %v88
    %v94 = vmul.f32 %v90, %v89
    %v95 = vadd.f32 %v91, 0.0
    %v96 = vadd.f32 %v92, 0.0
    %v97 = vadd.f32 %v93, 0.0
    %v98 = vadd.f32 %v94, 0.0
    %s99 = sld [smem:[#allocation7 + $0x2]]
    %s100 = sld [smem:[#allocation6 + $0x2]]
    %v101 = vstv %s100
    %v102 = vsub.f32 %v55, %v101
    %v103 = vsub.f32 %v56, %v101
    %v104 = vsub.f32 %v57, %v101
    %v105 = vsub.f32 %v58, %v101
    %v106 = vand.u32 2147483647, %v102
    %v107 = vand.u32 2147483647, %v103
    %v108 = vand.u32 2147483647, %v104
    %v109 = vand.u32 2147483647, %v105
    %v110 = vstv %s99
    %v111 = vmul.f32 %v110, %v106
    %v112 = vmul.f32 %v110, %v107
    %v113 = vmul.f32 %v110, %v108
    %v114 = vmul.f32 %v110, %v109
    %v115 = vadd.f32 %v111, 0.0
    %v116 = vadd.f32 %v112, 0.0
    %v117 = vadd.f32 %v113, 0.0
    %v118 = vadd.f32 %v114, 0.0
    %s119 = sld [smem:[#allocation7 + $0x3]]
    %s120 = sld [smem:[#allocation6 + $0x3]]
    %v121 = vstv %s120
    %v122 = vsub.f32 %v55, %v121
    %v123 = vsub.f32 %v56, %v121
    %v124 = vsub.f32 %v57, %v121
    %v125 = vsub.f32 %v58, %v121
    %v126 = vand.u32 2147483647, %v122
    %v127 = vand.u32 2147483647, %v123
    %v128 = vand.u32 2147483647, %v124
    %v129 = vand.u32 2147483647, %v125
    %v130 = vstv %s119
    %v131 = vmul.f32 %v130, %v126
    %v132 = vmul.f32 %v130, %v127
    %v133 = vmul.f32 %v130, %v128
    %v134 = vmul.f32 %v130, %v129
    %v135 = vadd.f32 %v131, 0.0
    %v136 = vadd.f32 %v132, 0.0
    %v137 = vadd.f32 %v133, 0.0
    %v138 = vadd.f32 %v134, 0.0
    %s139 = sld [smem:[#allocation7 + $0x4]]
    %s140 = sld [smem:[#allocation6 + $0x4]]
    %v141 = vstv %s140
    %v142 = vsub.f32 %v55, %v141
    %v143 = vsub.f32 %v56, %v141
    %v144 = vsub.f32 %v57, %v141
    %v145 = vsub.f32 %v58, %v141
    %v146 = vand.u32 2147483647, %v142
    %v147 = vand.u32 2147483647, %v143
    %v148 = vand.u32 2147483647, %v144
    %v149 = vand.u32 2147483647, %v145
    %v150 = vstv %s139
    %v151 = vmul.f32 %v150, %v146
    %v152 = vmul.f32 %v150, %v147
    %v153 = vmul.f32 %v150, %v148
    %v154 = vmul.f32 %v150, %v149
    %v155 = vadd.f32 %v75, %v151
    %v156 = vadd.f32 %v76, %v152
    %v157 = vadd.f32 %v77, %v153
    %v158 = vadd.f32 %v78, %v154
    %s159 = sld [smem:[#allocation7 + $0x5]]
    %s160 = sld [smem:[#allocation6 + $0x5]]
    %v161 = vstv %s160
    %v162 = vsub.f32 %v55, %v161
    %v163 = vsub.f32 %v56, %v161
    %v164 = vsub.f32 %v57, %v161
    %v165 = vsub.f32 %v58, %v161
    %v166 = vand.u32 2147483647, %v162
    %v167 = vand.u32 2147483647, %v163
    %v168 = vand.u32 2147483647, %v164
    %v169 = vand.u32 2147483647, %v165
    %v170 = vstv %s159
    %v171 = vmul.f32 %v170, %v166
    %v172 = vmul.f32 %v170, %v167
    %v173 = vmul.f32 %v170, %v168
    %v174 = vmul.f32 %v170, %v169
    %v175 = vadd.f32 %v95, %v171
    %v176 = vadd.f32 %v96, %v172
    %v177 = vadd.f32 %v97, %v173
    %v178 = vadd.f32 %v98, %v174
    %s179 = sld [smem:[#allocation7 + $0x6]]
    %s180 = sld [smem:[#allocation6 + $0x6]]
    %v181 = vstv %s180
    %v182 = vsub.f32 %v55, %v181
    %v183 = vsub.f32 %v56, %v181
    %v184 = vsub.f32 %v57, %v181
    %v185 = vsub.f32 %v58, %v181
    %v186 = vand.u32 2147483647, %v182
    %v187 = vand.u32 2147483647, %v183
    %v188 = vand.u32 2147483647, %v184
    %v189 = vand.u32 2147483647, %v185
    %v190 = vstv %s179
    %v191 = vmul.f32 %v190, %v186
    %v192 = vmul.f32 %v190, %v187
    %v193 = vmul.f32 %v190, %v188
    %v194 = vmul.f32 %v190, %v189
    %v195 = vadd.f32 %v115, %v191
    %v196 = vadd.f32 %v116, %v192
    %v197 = vadd.f32 %v117, %v193
    %v198 = vadd.f32 %v118, %v194
    %s199 = sld [smem:[#allocation7 + $0x7]]
    %s200 = sld [smem:[#allocation6 + $0x7]]
    %v201 = vstv %s200
    %v202 = vsub.f32 %v55, %v201
    %v203 = vsub.f32 %v56, %v201
    %v204 = vsub.f32 %v57, %v201
    %v205 = vsub.f32 %v58, %v201
    %v206 = vand.u32 2147483647, %v202
    %v207 = vand.u32 2147483647, %v203
    %v208 = vand.u32 2147483647, %v204
    %v209 = vand.u32 2147483647, %v205
    %v210 = vstv %s199
    %v211 = vmul.f32 %v210, %v206
    %v212 = vmul.f32 %v210, %v207
    %v213 = vmul.f32 %v210, %v208
    %v214 = vmul.f32 %v210, %v209
    %v215 = vadd.f32 %v135, %v211
    %v216 = vadd.f32 %v136, %v212
    %v217 = vadd.f32 %v137, %v213
    %v218 = vadd.f32 %v138, %v214
    %s219 = sld [smem:[#allocation7 + $0x8]]
    %s220 = sld [smem:[#allocation6 + $0x8]]
    %v221 = vstv %s220
    %v222 = vsub.f32 %v55, %v221
    %v223 = vsub.f32 %v56, %v221
    %v224 = vsub.f32 %v57, %v221
    %v225 = vsub.f32 %v58, %v221
    %v226 = vand.u32 2147483647, %v222
    %v227 = vand.u32 2147483647, %v223
    %v228 = vand.u32 2147483647, %v224
    %v229 = vand.u32 2147483647, %v225
    %v230 = vstv %s219
    %v231 = vmul.f32 %v230, %v226
    %v232 = vmul.f32 %v230, %v227
    %v233 = vmul.f32 %v230, %v228
    %v234 = vmul.f32 %v230, %v229
    %v235 = vadd.f32 %v155, %v231
    %v236 = vadd.f32 %v156, %v232
    %v237 = vadd.f32 %v157, %v233
    %v238 = vadd.f32 %v158, %v234
    %s239 = sld [smem:[#allocation7 + $0x9]]
    %s240 = sld [smem:[#allocation6 + $0x9]]
    %v241 = vstv %s240
    %v242 = vsub.f32 %v55, %v241
    %v243 = vsub.f32 %v56, %v241
    %v244 = vsub.f32 %v57, %v241
    %v245 = vsub.f32 %v58, %v241
    %v246 = vand.u32 2147483647, %v242
    %v247 = vand.u32 2147483647, %v243
    %v248 = vand.u32 2147483647, %v244
    %v249 = vand.u32 2147483647, %v245
    %v250 = vstv %s239
    %v251 = vmul.f32 %v250, %v246
    %v252 = vmul.f32 %v250, %v247
    %v253 = vmul.f32 %v250, %v248
    %v254 = vmul.f32 %v250, %v249
    %v255 = vadd.f32 %v175, %v251
    %v256 = vadd.f32 %v176, %v252
    %v257 = vadd.f32 %v177, %v253
    %v258 = vadd.f32 %v178, %v254
    %s259 = sld [smem:[#allocation7 + $0xa]]
    %s260 = sld [smem:[#allocation6 + $0xa]]
    %v261 = vstv %s260
    %v262 = vsub.f32 %v55, %v261
    %v263 = vsub.f32 %v56, %v261
    %v264 = vsub.f32 %v57, %v261
    %v265 = vsub.f32 %v58, %v261
    %v266 = vand.u32 2147483647, %v262
    %v267 = vand.u32 2147483647, %v263
    %v268 = vand.u32 2147483647, %v264
    %v269 = vand.u32 2147483647, %v265
    %v270 = vstv %s259
    %v271 = vmul.f32 %v270, %v266
    %v272 = vmul.f32 %v270, %v267
    %v273 = vmul.f32 %v270, %v268
    %v274 = vmul.f32 %v270, %v269
    %v275 = vadd.f32 %v195, %v271
    %v276 = vadd.f32 %v196, %v272
    %v277 = vadd.f32 %v197, %v273
    %v278 = vadd.f32 %v198, %v274
    %s279 = sld [smem:[#allocation7 + $0xb]]
    %s280 = sld [smem:[#allocation6 + $0xb]]
    %v281 = vstv %s280
    %v282 = vsub.f32 %v55, %v281
    %v283 = vsub.f32 %v56, %v281
    %v284 = vsub.f32 %v57, %v281
    %v285 = vsub.f32 %v58, %v281
    %v286 = vand.u32 2147483647, %v282
    %v287 = vand.u32 2147483647, %v283
    %v288 = vand.u32 2147483647, %v284
    %v289 = vand.u32 2147483647, %v285
    %v290 = vstv %s279
    %v291 = vmul.f32 %v290, %v286
    %v292 = vmul.f32 %v290, %v287
    %v293 = vmul.f32 %v290, %v288
    %v294 = vmul.f32 %v290, %v289
    %v295 = vadd.f32 %v215, %v291
    %v296 = vadd.f32 %v216, %v292
    %v297 = vadd.f32 %v217, %v293
    %v298 = vadd.f32 %v218, %v294
    %s299 = sld [smem:[#allocation7 + $0xc]]
    %s300 = sld [smem:[#allocation6 + $0xc]]
    %v301 = vstv %s300
    %v302 = vsub.f32 %v55, %v301
    %v303 = vsub.f32 %v56, %v301
    %v304 = vsub.f32 %v57, %v301
    %v305 = vsub.f32 %v58, %v301
    %v306 = vand.u32 2147483647, %v302
    %v307 = vand.u32 2147483647, %v303
    %v308 = vand.u32 2147483647, %v304
    %v309 = vand.u32 2147483647, %v305
    %v310 = vstv %s299
    %v311 = vmul.f32 %v310, %v306
    %v312 = vmul.f32 %v310, %v307
    %v313 = vmul.f32 %v310, %v308
    %v314 = vmul.f32 %v310, %v309
    %v315 = vadd.f32 %v235, %v311
    %v316 = vadd.f32 %v236, %v312
    %v317 = vadd.f32 %v237, %v313
    %v318 = vadd.f32 %v238, %v314
    %s319 = sld [smem:[#allocation7 + $0xd]]
    %s320 = sld [smem:[#allocation6 + $0xd]]
    %v321 = vstv %s320
    %v322 = vsub.f32 %v55, %v321
    %v323 = vsub.f32 %v56, %v321
    %v324 = vsub.f32 %v57, %v321
    %v325 = vsub.f32 %v58, %v321
    %v326 = vand.u32 2147483647, %v322
    %v327 = vand.u32 2147483647, %v323
    %v328 = vand.u32 2147483647, %v324
    %v329 = vand.u32 2147483647, %v325
    %v330 = vstv %s319
    %v331 = vmul.f32 %v330, %v326
    %v332 = vmul.f32 %v330, %v327
    %v333 = vmul.f32 %v330, %v328
    %v334 = vmul.f32 %v330, %v329
    %v335 = vadd.f32 %v255, %v331
    %v336 = vadd.f32 %v256, %v332
    %v337 = vadd.f32 %v257, %v333
    %v338 = vadd.f32 %v258, %v334
    %s339 = sld [smem:[#allocation7 + $0xe]]
    %s340 = sld [smem:[#allocation6 + $0xe]]
    %v341 = vstv %s340
    %v342 = vsub.f32 %v55, %v341
    %v343 = vsub.f32 %v56, %v341
    %v344 = vsub.f32 %v57, %v341
    %v345 = vsub.f32 %v58, %v341
    %v346 = vand.u32 2147483647, %v342
    %v347 = vand.u32 2147483647, %v343
    %v348 = vand.u32 2147483647, %v344
    %v349 = vand.u32 2147483647, %v345
    %v350 = vstv %s339
    %v351 = vmul.f32 %v350, %v346
    %v352 = vmul.f32 %v350, %v347
    %v353 = vmul.f32 %v350, %v348
    %v354 = vmul.f32 %v350, %v349
    %v355 = vadd.f32 %v275, %v351
    %v356 = vadd.f32 %v276, %v352
    %v357 = vadd.f32 %v277, %v353
    %v358 = vadd.f32 %v278, %v354
    %s359 = sld [smem:[#allocation7 + $0xf]]
    %s360 = sld [smem:[#allocation6 + $0xf]]
    %v361 = vstv %s360
    %v362 = vsub.f32 %v55, %v361
    %v363 = vsub.f32 %v56, %v361
    %v364 = vsub.f32 %v57, %v361
    %v365 = vsub.f32 %v58, %v361
    %v366 = vand.u32 2147483647, %v362
    %v367 = vand.u32 2147483647, %v363
    %v368 = vand.u32 2147483647, %v364
    %v369 = vand.u32 2147483647, %v365
    %v370 = vstv %s359
    %v371 = vmul.f32 %v370, %v366
    %v372 = vmul.f32 %v370, %v367
    %v373 = vmul.f32 %v370, %v368
    %v374 = vmul.f32 %v370, %v369
    %v375 = vadd.f32 %v295, %v371
    %v376 = vadd.f32 %v296, %v372
    %v377 = vadd.f32 %v297, %v373
    %v378 = vadd.f32 %v298, %v374
    %s379 = sld [smem:[#allocation7 + $0x10]]
    %s380 = sld [smem:[#allocation6 + $0x10]]
    %v381 = vstv %s380
    %v382 = vsub.f32 %v55, %v381
    %v383 = vsub.f32 %v56, %v381
    %v384 = vsub.f32 %v57, %v381
    %v385 = vsub.f32 %v58, %v381
    %v386 = vand.u32 2147483647, %v382
    %v387 = vand.u32 2147483647, %v383
    %v388 = vand.u32 2147483647, %v384
    %v389 = vand.u32 2147483647, %v385
    %v390 = vstv %s379
    %v391 = vmul.f32 %v390, %v386
    %v392 = vmul.f32 %v390, %v387
    %v393 = vmul.f32 %v390, %v388
    %v394 = vmul.f32 %v390, %v389
    %v395 = vadd.f32 %v315, %v391
    %v396 = vadd.f32 %v316, %v392
    %v397 = vadd.f32 %v317, %v393
    %v398 = vadd.f32 %v318, %v394
    %s399 = sld [smem:[#allocation7 + $0x11]]
    %s400 = sld [smem:[#allocation6 + $0x11]]
    %v401 = vstv %s400
    %v402 = vsub.f32 %v55, %v401
    %v403 = vsub.f32 %v56, %v401
    %v404 = vsub.f32 %v57, %v401
    %v405 = vsub.f32 %v58, %v401
    %v406 = vand.u32 2147483647, %v402
    %v407 = vand.u32 2147483647, %v403
    %v408 = vand.u32 2147483647, %v404
    %v409 = vand.u32 2147483647, %v405
    %v410 = vstv %s399
    %v411 = vmul.f32 %v410, %v406
    %v412 = vmul.f32 %v410, %v407
    %v413 = vmul.f32 %v410, %v408
    %v414 = vmul.f32 %v410, %v409
    %v415 = vadd.f32 %v335, %v411
    %v416 = vadd.f32 %v336, %v412
    %v417 = vadd.f32 %v337, %v413
    %v418 = vadd.f32 %v338, %v414
    %s419 = sld [smem:[#allocation7 + $0x12]]
    %s420 = sld [smem:[#allocation6 + $0x12]]
    %v421 = vstv %s420
    %v422 = vsub.f32 %v55, %v421
    %v423 = vsub.f32 %v56, %v421
    %v424 = vsub.f32 %v57, %v421
    %v425 = vsub.f32 %v58, %v421
    %v426 = vand.u32 2147483647, %v422
    %v427 = vand.u32 2147483647, %v423
    %v428 = vand.u32 2147483647, %v424
    %v429 = vand.u32 2147483647, %v425
    %v430 = vstv %s419
    %v431 = vmul.f32 %v430, %v426
    %v432 = vmul.f32 %v430, %v427
    %v433 = vmul.f32 %v430, %v428
    %v434 = vmul.f32 %v430, %v429
    %v435 = vadd.f32 %v355, %v431
    %v436 = vadd.f32 %v356, %v432
    %v437 = vadd.f32 %v357, %v433
    %v438 = vadd.f32 %v358, %v434
    %s439 = sld [smem:[#allocation7 + $0x13]]
    %s440 = sld [smem:[#allocation6 + $0x13]]
    %v441 = vstv %s440
    %v442 = vsub.f32 %v55, %v441
    %v443 = vsub.f32 %v56, %v441
    %v444 = vsub.f32 %v57, %v441
    %v445 = vsub.f32 %v58, %v441
    %v446 = vand.u32 2147483647, %v442
    %v447 = vand.u32 2147483647, %v443
    %v448 = vand.u32 2147483647, %v444
    %v449 = vand.u32 2147483647, %v445
    %v450 = vstv %s439
    %v451 = vmul.f32 %v450, %v446
    %v452 = vmul.f32 %v450, %v447
    %v453 = vmul.f32 %v450, %v448
    %v454 = vmul.f32 %v450, %v449
    %v455 = vadd.f32 %v375, %v451
    %v456 = vadd.f32 %v376, %v452
    %v457 = vadd.f32 %v377, %v453
    %v458 = vadd.f32 %v378, %v454
    %s459 = sld [smem:[#allocation7 + $0x14]]
    %s460 = sld [smem:[#allocation6 + $0x14]]
    %v461 = vstv %s460
    %v462 = vsub.f32 %v55, %v461
    %v463 = vsub.f32 %v56, %v461
    %v464 = vsub.f32 %v57, %v461
    %v465 = vsub.f32 %v58, %v461
    %v466 = vand.u32 2147483647, %v462
    %v467 = vand.u32 2147483647, %v463
    %v468 = vand.u32 2147483647, %v464
    %v469 = vand.u32 2147483647, %v465
    %v470 = vstv %s459
    %v471 = vmul.f32 %v470, %v466
    %v472 = vmul.f32 %v470, %v467
    %v473 = vmul.f32 %v470, %v468
    %v474 = vmul.f32 %v470, %v469
    %v475 = vadd.f32 %v395, %v471
    %v476 = vadd.f32 %v396, %v472
    %v477 = vadd.f32 %v397, %v473
    %v478 = vadd.f32 %v398, %v474
    %s479 = sld [smem:[#allocation7 + $0x15]]
    %s480 = sld [smem:[#allocation6 + $0x15]]
    %v481 = vstv %s480
    %v482 = vsub.f32 %v55, %v481
    %v483 = vsub.f32 %v56, %v481
    %v484 = vsub.f32 %v57, %v481
    %v485 = vsub.f32 %v58, %v481
    %v486 = vand.u32 2147483647, %v482
    %v487 = vand.u32 2147483647, %v483
    %v488 = vand.u32 2147483647, %v484
    %v489 = vand.u32 2147483647, %v485
    %v490 = vstv %s479
    %v491 = vmul.f32 %v490, %v486
    %v492 = vmul.f32 %v490, %v487
    %v493 = vmul.f32 %v490, %v488
    %v494 = vmul.f32 %v490, %v489
    %v495 = vadd.f32 %v415, %v491
    %v496 = vadd.f32 %v416, %v492
    %v497 = vadd.f32 %v417, %v493
    %v498 = vadd.f32 %v418, %v494
    %s499 = sld [smem:[#allocation7 + $0x16]]
    %s500 = sld [smem:[#allocation6 + $0x16]]
    %v501 = vstv %s500
    %v502 = vsub.f32 %v55, %v501
    %v503 = vsub.f32 %v56, %v501
    %v504 = vsub.f32 %v57, %v501
    %v505 = vsub.f32 %v58, %v501
    %v506 = vand.u32 2147483647, %v502
    %v507 = vand.u32 2147483647, %v503
    %v508 = vand.u32 2147483647, %v504
    %v509 = vand.u32 2147483647, %v505
    %v510 = vstv %s499
    %v511 = vmul.f32 %v510, %v506
    %v512 = vmul.f32 %v510, %v507
    %v513 = vmul.f32 %v510, %v508
    %v514 = vmul.f32 %v510, %v509
    %v515 = vadd.f32 %v435, %v511
    %v516 = vadd.f32 %v436, %v512
    %v517 = vadd.f32 %v437, %v513
    %v518 = vadd.f32 %v438, %v514
    %s519 = sld [smem:[#allocation7 + $0x17]]
    %s520 = sld [smem:[#allocation6 + $0x17]]
    %v521 = vstv %s520
    %v522 = vsub.f32 %v55, %v521
    %v523 = vsub.f32 %v56, %v521
    %v524 = vsub.f32 %v57, %v521
    %v525 = vsub.f32 %v58, %v521
    %v526 = vand.u32 2147483647, %v522
    %v527 = vand.u32 2147483647, %v523
    %v528 = vand.u32 2147483647, %v524
    %v529 = vand.u32 2147483647, %v525
    %v530 = vstv %s519
    %v531 = vmul.f32 %v530, %v526
    %v532 = vmul.f32 %v530, %v527
    %v533 = vmul.f32 %v530, %v528
    %v534 = vmul.f32 %v530, %v529
    %v535 = vadd.f32 %v455, %v531
    %v536 = vadd.f32 %v456, %v532
    %v537 = vadd.f32 %v457, %v533
    %v538 = vadd.f32 %v458, %v534
    %s539 = sld [smem:[#allocation7 + $0x18]]
    %s540 = sld [smem:[#allocation6 + $0x18]]
    %v541 = vstv %s540
    %v542 = vsub.f32 %v55, %v541
    %v543 = vsub.f32 %v56, %v541
    %v544 = vsub.f32 %v57, %v541
    %v545 = vsub.f32 %v58, %v541
    %v546 = vand.u32 2147483647, %v542
    %v547 = vand.u32 2147483647, %v543
    %v548 = vand.u32 2147483647, %v544
    %v549 = vand.u32 2147483647, %v545
    %v550 = vstv %s539
    %v551 = vmul.f32 %v550, %v546
    %v552 = vmul.f32 %v550, %v547
    %v553 = vmul.f32 %v550, %v548
    %v554 = vmul.f32 %v550, %v549
    %v555 = vadd.f32 %v475, %v551
    %v556 = vadd.f32 %v476, %v552
    %v557 = vadd.f32 %v477, %v553
    %v558 = vadd.f32 %v478, %v554
    %s559 = sld [smem:[#allocation7 + $0x19]]
    %s560 = sld [smem:[#allocation6 + $0x19]]
    %v561 = vstv %s560
    %v562 = vsub.f32 %v55, %v561
    %v563 = vsub.f32 %v56, %v561
    %v564 = vsub.f32 %v57, %v561
    %v565 = vsub.f32 %v58, %v561
    %v566 = vand.u32 2147483647, %v562
    %v567 = vand.u32 2147483647, %v563
    %v568 = vand.u32 2147483647, %v564
    %v569 = vand.u32 2147483647, %v565
    %v570 = vstv %s559
    %v571 = vmul.f32 %v570, %v566
    %v572 = vmul.f32 %v570, %v567
    %v573 = vmul.f32 %v570, %v568
    %v574 = vmul.f32 %v570, %v569
    %v575 = vadd.f32 %v495, %v571
    %v576 = vadd.f32 %v496, %v572
    %v577 = vadd.f32 %v497, %v573
    %v578 = vadd.f32 %v498, %v574
    %s579 = sld [smem:[#allocation7 + $0x1a]]
    %s580 = sld [smem:[#allocation6 + $0x1a]]
    %v581 = vstv %s580
    %v582 = vsub.f32 %v55, %v581
    %v583 = vsub.f32 %v56, %v581
    %v584 = vsub.f32 %v57, %v581
    %v585 = vsub.f32 %v58, %v581
    %v586 = vand.u32 2147483647, %v582
    %v587 = vand.u32 2147483647, %v583
    %v588 = vand.u32 2147483647, %v584
    %v589 = vand.u32 2147483647, %v585
    %v590 = vstv %s579
    %v591 = vmul.f32 %v590, %v586
    %v592 = vmul.f32 %v590, %v587
    %v593 = vmul.f32 %v590, %v588
    %v594 = vmul.f32 %v590, %v589
    %v595 = vadd.f32 %v515, %v591
    %v596 = vadd.f32 %v516, %v592
    %v597 = vadd.f32 %v517, %v593
    %v598 = vadd.f32 %v518, %v594
    %s599 = sld [smem:[#allocation7 + $0x1b]]
    %s600 = sld [smem:[#allocation6 + $0x1b]]
    %v601 = vstv %s600
    %v602 = vsub.f32 %v55, %v601
    %v603 = vsub.f32 %v56, %v601
    %v604 = vsub.f32 %v57, %v601
    %v605 = vsub.f32 %v58, %v601
    %v606 = vand.u32 2147483647, %v602
    %v607 = vand.u32 2147483647, %v603
    %v608 = vand.u32 2147483647, %v604
    %v609 = vand.u32 2147483647, %v605
    %v610 = vstv %s599
    %v611 = vmul.f32 %v610, %v606
    %v612 = vmul.f32 %v610, %v607
    %v613 = vmul.f32 %v610, %v608
    %v614 = vmul.f32 %v610, %v609
    %v615 = vadd.f32 %v535, %v611
    %v616 = vadd.f32 %v536, %v612
    %v617 = vadd.f32 %v537, %v613
    %v618 = vadd.f32 %v538, %v614
    %s619 = sld [smem:[#allocation7 + $0x1c]]
    %s620 = sld [smem:[#allocation6 + $0x1c]]
    %v621 = vstv %s620
    %v622 = vsub.f32 %v55, %v621
    %v623 = vsub.f32 %v56, %v621
    %v624 = vsub.f32 %v57, %v621
    %v625 = vsub.f32 %v58, %v621
    %v626 = vand.u32 2147483647, %v622
    %v627 = vand.u32 2147483647, %v623
    %v628 = vand.u32 2147483647, %v624
    %v629 = vand.u32 2147483647, %v625
    %v630 = vstv %s619
    %v631 = vmul.f32 %v630, %v626
    %v632 = vmul.f32 %v630, %v627
    %v633 = vmul.f32 %v630, %v628
    %v634 = vmul.f32 %v630, %v629
    %v635 = vadd.f32 %v555, %v631
    %v636 = vadd.f32 %v556, %v632
    %v637 = vadd.f32 %v557, %v633
    %v638 = vadd.f32 %v558, %v634
    %s639 = sld [smem:[#allocation7 + $0x1d]]
    %s640 = sld [smem:[#allocation6 + $0x1d]]
    %v641 = vstv %s640
    %v642 = vsub.f32 %v55, %v641
    %v643 = vsub.f32 %v56, %v641
    %v644 = vsub.f32 %v57, %v641
    %v645 = vsub.f32 %v58, %v641
    %v646 = vand.u32 2147483647, %v642
    %v647 = vand.u32 2147483647, %v643
    %v648 = vand.u32 2147483647, %v644
    %v649 = vand.u32 2147483647, %v645
    %v650 = vstv %s639
    %v651 = vmul.f32 %v650, %v646
    %v652 = vmul.f32 %v650, %v647
    %v653 = vmul.f32 %v650, %v648
    %v654 = vmul.f32 %v650, %v649
    %v655 = vadd.f32 %v575, %v651
    %v656 = vadd.f32 %v576, %v652
    %v657 = vadd.f32 %v577, %v653
    %v658 = vadd.f32 %v578, %v654
    %s659 = sld [smem:[#allocation7 + $0x1e]]
    %s660 = sld [smem:[#allocation6 + $0x1e]]
    %v661 = vstv %s660
    %v662 = vsub.f32 %v55, %v661
    %v663 = vsub.f32 %v56, %v661
    %v664 = vsub.f32 %v57, %v661
    %v665 = vsub.f32 %v58, %v661
    %v666 = vand.u32 2147483647, %v662
    %v667 = vand.u32 2147483647, %v663
    %v668 = vand.u32 2147483647, %v664
    %v669 = vand.u32 2147483647, %v665
    %v670 = vstv %s659
    %v671 = vmul.f32 %v670, %v666
    %v672 = vmul.f32 %v670, %v667
    %v673 = vmul.f32 %v670, %v668
    %v674 = vmul.f32 %v670, %v669
    %v675 = vadd.f32 %v595, %v671
    %v676 = vadd.f32 %v596, %v672
    %v677 = vadd.f32 %v597, %v673
    %v678 = vadd.f32 %v598, %v674
    %s679 = sld [smem:[#allocation7 + $0x1f]]
    %s680 = sld [smem:[#allocation6 + $0x1f]]
    %v681 = vstv %s680
    %v682 = vsub.f32 %v55, %v681
    %v683 = vsub.f32 %v56, %v681
    %v684 = vsub.f32 %v57, %v681
    %v685 = vsub.f32 %v58, %v681
    %v686 = vand.u32 2147483647, %v682
    %v687 = vand.u32 2147483647, %v683
    %v688 = vand.u32 2147483647, %v684
    %v689 = vand.u32 2147483647, %v685
    %v690 = vstv %s679
    %v691 = vmul.f32 %v690, %v686
    %v692 = vmul.f32 %v690, %v687
    %v693 = vmul.f32 %v690, %v688
    %v694 = vmul.f32 %v690, %v689
    %v695 = vadd.f32 %v615, %v691
    %v696 = vadd.f32 %v616, %v692
    %v697 = vadd.f32 %v617, %v693
    %v698 = vadd.f32 %v618, %v694
    %s699 = sld [smem:[#allocation7 + $0x20]]
    %s700 = sld [smem:[#allocation6 + $0x20]]
    %v701 = vstv %s700
    %v702 = vsub.f32 %v55, %v701
    %v703 = vsub.f32 %v56, %v701
    %v704 = vsub.f32 %v57, %v701
    %v705 = vsub.f32 %v58, %v701
    %v706 = vand.u32 2147483647, %v702
    %v707 = vand.u32 2147483647, %v703
    %v708 = vand.u32 2147483647, %v704
    %v709 = vand.u32 2147483647, %v705
    %v710 = vstv %s699
    %v711 = vmul.f32 %v710, %v706
    %v712 = vmul.f32 %v710, %v707
    %v713 = vmul.f32 %v710, %v708
    %v714 = vmul.f32 %v710, %v709
    %v715 = vadd.f32 %v635, %v711
    %v716 = vadd.f32 %v636, %v712
    %v717 = vadd.f32 %v637, %v713
    %v718 = vadd.f32 %v638, %v714
    %s719 = sld [smem:[#allocation7 + $0x21]]
    %s720 = sld [smem:[#allocation6 + $0x21]]
    %v721 = vstv %s720
    %v722 = vsub.f32 %v55, %v721
    %v723 = vsub.f32 %v56, %v721
    %v724 = vsub.f32 %v57, %v721
    %v725 = vsub.f32 %v58, %v721
    %v726 = vand.u32 2147483647, %v722
    %v727 = vand.u32 2147483647, %v723
    %v728 = vand.u32 2147483647, %v724
    %v729 = vand.u32 2147483647, %v725
    %v730 = vstv %s719
    %v731 = vmul.f32 %v730, %v726
    %v732 = vmul.f32 %v730, %v727
    %v733 = vmul.f32 %v730, %v728
    %v734 = vmul.f32 %v730, %v729
    %v735 = vadd.f32 %v655, %v731
    %v736 = vadd.f32 %v656, %v732
    %v737 = vadd.f32 %v657, %v733
    %v738 = vadd.f32 %v658, %v734
    %s739 = sld [smem:[#allocation7 + $0x22]]
    %s740 = sld [smem:[#allocation6 + $0x22]]
    %v741 = vstv %s740
    %v742 = vsub.f32 %v55, %v741
    %v743 = vsub.f32 %v56, %v741
    %v744 = vsub.f32 %v57, %v741
    %v745 = vsub.f32 %v58, %v741
    %v746 = vand.u32 2147483647, %v742
    %v747 = vand.u32 2147483647, %v743
    %v748 = vand.u32 2147483647, %v744
    %v749 = vand.u32 2147483647, %v745
    %v750 = vstv %s739
    %v751 = vmul.f32 %v750, %v746
    %v752 = vmul.f32 %v750, %v747
    %v753 = vmul.f32 %v750, %v748
    %v754 = vmul.f32 %v750, %v749
    %v755 = vadd.f32 %v675, %v751
    %v756 = vadd.f32 %v676, %v752
    %v757 = vadd.f32 %v677, %v753
    %v758 = vadd.f32 %v678, %v754
    %s759 = sld [smem:[#allocation7 + $0x23]]
    %s760 = sld [smem:[#allocation6 + $0x23]]
    %v761 = vstv %s760
    %v762 = vsub.f32 %v55, %v761
    %v763 = vsub.f32 %v56, %v761
    %v764 = vsub.f32 %v57, %v761
    %v765 = vsub.f32 %v58, %v761
    %v766 = vand.u32 2147483647, %v762
    %v767 = vand.u32 2147483647, %v763
    %v768 = vand.u32 2147483647, %v764
    %v769 = vand.u32 2147483647, %v765
    %v770 = vstv %s759
    %v771 = vmul.f32 %v770, %v766
    %v772 = vmul.f32 %v770, %v767
    %v773 = vmul.f32 %v770, %v768
    %v774 = vmul.f32 %v770, %v769
    %v775 = vadd.f32 %v695, %v771
    %v776 = vadd.f32 %v696, %v772
    %v777 = vadd.f32 %v697, %v773
    %v778 = vadd.f32 %v698, %v774
    %s779 = sld [smem:[#allocation7 + $0x24]]
    %s780 = sld [smem:[#allocation6 + $0x24]]
    %v781 = vstv %s780
    %v782 = vsub.f32 %v55, %v781
    %v783 = vsub.f32 %v56, %v781
    %v784 = vsub.f32 %v57, %v781
    %v785 = vsub.f32 %v58, %v781
    %v786 = vand.u32 2147483647, %v782
    %v787 = vand.u32 2147483647, %v783
    %v788 = vand.u32 2147483647, %v784
    %v789 = vand.u32 2147483647, %v785
    %v790 = vstv %s779
    %v791 = vmul.f32 %v790, %v786
    %v792 = vmul.f32 %v790, %v787
    %v793 = vmul.f32 %v790, %v788
    %v794 = vmul.f32 %v790, %v789
    %v795 = vadd.f32 %v715, %v791
    %v796 = vadd.f32 %v716, %v792
    %v797 = vadd.f32 %v717, %v793
    %v798 = vadd.f32 %v718, %v794
    %s799 = sld [smem:[#allocation7 + $0x25]]
    %s800 = sld [smem:[#allocation6 + $0x25]]
    %v801 = vstv %s800
    %v802 = vsub.f32 %v55, %v801
    %v803 = vsub.f32 %v56, %v801
    %v804 = vsub.f32 %v57, %v801
    %v805 = vsub.f32 %v58, %v801
    %v806 = vand.u32 2147483647, %v802
    %v807 = vand.u32 2147483647, %v803
    %v808 = vand.u32 2147483647, %v804
    %v809 = vand.u32 2147483647, %v805
    %v810 = vstv %s799
    %v811 = vmul.f32 %v810, %v806
    %v812 = vmul.f32 %v810, %v807
    %v813 = vmul.f32 %v810, %v808
    %v814 = vmul.f32 %v810, %v809
    %v815 = vadd.f32 %v735, %v811
    %v816 = vadd.f32 %v736, %v812
    %v817 = vadd.f32 %v737, %v813
    %v818 = vadd.f32 %v738, %v814
    %s819 = sld [smem:[#allocation7 + $0x26]]
    %s820 = sld [smem:[#allocation6 + $0x26]]
    %v821 = vstv %s820
    %v822 = vsub.f32 %v55, %v821
    %v823 = vsub.f32 %v56, %v821
    %v824 = vsub.f32 %v57, %v821
    %v825 = vsub.f32 %v58, %v821
    %v826 = vand.u32 2147483647, %v822
    %v827 = vand.u32 2147483647, %v823
    %v828 = vand.u32 2147483647, %v824
    %v829 = vand.u32 2147483647, %v825
    %v830 = vstv %s819
    %v831 = vmul.f32 %v830, %v826
    %v832 = vmul.f32 %v830, %v827
    %v833 = vmul.f32 %v830, %v828
    %v834 = vmul.f32 %v830, %v829
    %v835 = vadd.f32 %v755, %v831
    %v836 = vadd.f32 %v756, %v832
    %v837 = vadd.f32 %v757, %v833
    %v838 = vadd.f32 %v758, %v834
    %s839 = sld [smem:[#allocation7 + $0x27]]
    %s840 = sld [smem:[#allocation6 + $0x27]]
    %v841 = vstv %s840
    %v842 = vsub.f32 %v55, %v841
    %v843 = vsub.f32 %v56, %v841
    %v844 = vsub.f32 %v57, %v841
    %v845 = vsub.f32 %v58, %v841
    %v846 = vand.u32 2147483647, %v842
    %v847 = vand.u32 2147483647, %v843
    %v848 = vand.u32 2147483647, %v844
    %v849 = vand.u32 2147483647, %v845
    %v850 = vstv %s839
    %v851 = vmul.f32 %v850, %v846
    %v852 = vmul.f32 %v850, %v847
    %v853 = vmul.f32 %v850, %v848
    %v854 = vmul.f32 %v850, %v849
    %v855 = vadd.f32 %v775, %v851
    %v856 = vadd.f32 %v776, %v852
    %v857 = vadd.f32 %v777, %v853
    %v858 = vadd.f32 %v778, %v854
    %s859 = sld [smem:[#allocation7 + $0x28]]
    %s860 = sld [smem:[#allocation6 + $0x28]]
    %v861 = vstv %s860
    %v862 = vsub.f32 %v55, %v861
    %v863 = vsub.f32 %v56, %v861
    %v864 = vsub.f32 %v57, %v861
    %v865 = vsub.f32 %v58, %v861
    %v866 = vand.u32 2147483647, %v862
    %v867 = vand.u32 2147483647, %v863
    %v868 = vand.u32 2147483647, %v864
    %v869 = vand.u32 2147483647, %v865
    %v870 = vstv %s859
    %v871 = vmul.f32 %v870, %v866
    %v872 = vmul.f32 %v870, %v867
    %v873 = vmul.f32 %v870, %v868
    %v874 = vmul.f32 %v870, %v869
    %v875 = vadd.f32 %v795, %v871
    %v876 = vadd.f32 %v796, %v872
    %v877 = vadd.f32 %v797, %v873
    %v878 = vadd.f32 %v798, %v874
    %s879 = sld [smem:[#allocation7 + $0x29]]
    %s880 = sld [smem:[#allocation6 + $0x29]]
    %v881 = vstv %s880
    %v882 = vsub.f32 %v55, %v881
    %v883 = vsub.f32 %v56, %v881
    %v884 = vsub.f32 %v57, %v881
    %v885 = vsub.f32 %v58, %v881
    %v886 = vand.u32 2147483647, %v882
    %v887 = vand.u32 2147483647, %v883
    %v888 = vand.u32 2147483647, %v884
    %v889 = vand.u32 2147483647, %v885
    %v890 = vstv %s879
    %v891 = vmul.f32 %v890, %v886
    %v892 = vmul.f32 %v890, %v887
    %v893 = vmul.f32 %v890, %v888
    %v894 = vmul.f32 %v890, %v889
    %v895 = vadd.f32 %v815, %v891
    %v896 = vadd.f32 %v816, %v892
    %v897 = vadd.f32 %v817, %v893
    %v898 = vadd.f32 %v818, %v894
    %s899 = sld [smem:[#allocation7 + $0x2a]]
    %s900 = sld [smem:[#allocation6 + $0x2a]]
    %v901 = vstv %s900
    %v902 = vsub.f32 %v55, %v901
    %v903 = vsub.f32 %v56, %v901
    %v904 = vsub.f32 %v57, %v901
    %v905 = vsub.f32 %v58, %v901
    %v906 = vand.u32 2147483647, %v902
    %v907 = vand.u32 2147483647, %v903
    %v908 = vand.u32 2147483647, %v904
    %v909 = vand.u32 2147483647, %v905
    %v910 = vstv %s899
    %v911 = vmul.f32 %v910, %v906
    %v912 = vmul.f32 %v910, %v907
    %v913 = vmul.f32 %v910, %v908
    %v914 = vmul.f32 %v910, %v909
    %v915 = vadd.f32 %v835, %v911
    %v916 = vadd.f32 %v836, %v912
    %v917 = vadd.f32 %v837, %v913
    %v918 = vadd.f32 %v838, %v914
    %s919 = sld [smem:[#allocation7 + $0x2b]]
    %s920 = sld [smem:[#allocation6 + $0x2b]]
    %v921 = vstv %s920
    %v922 = vsub.f32 %v55, %v921
    %v923 = vsub.f32 %v56, %v921
    %v924 = vsub.f32 %v57, %v921
    %v925 = vsub.f32 %v58, %v921
    %v926 = vand.u32 2147483647, %v922
    %v927 = vand.u32 2147483647, %v923
    %v928 = vand.u32 2147483647, %v924
    %v929 = vand.u32 2147483647, %v925
    %v930 = vstv %s919
    %v931 = vmul.f32 %v930, %v926
    %v932 = vmul.f32 %v930, %v927
    %v933 = vmul.f32 %v930, %v928
    %v934 = vmul.f32 %v930, %v929
    %v935 = vadd.f32 %v855, %v931
    %v936 = vadd.f32 %v856, %v932
    %v937 = vadd.f32 %v857, %v933
    %v938 = vadd.f32 %v858, %v934
    %s939 = sld [smem:[#allocation7 + $0x2c]]
    %s940 = sld [smem:[#allocation6 + $0x2c]]
    %v941 = vstv %s940
    %v942 = vsub.f32 %v55, %v941
    %v943 = vsub.f32 %v56, %v941
    %v944 = vsub.f32 %v57, %v941
    %v945 = vsub.f32 %v58, %v941
    %v946 = vand.u32 2147483647, %v942
    %v947 = vand.u32 2147483647, %v943
    %v948 = vand.u32 2147483647, %v944
    %v949 = vand.u32 2147483647, %v945
    %v950 = vstv %s939
    %v951 = vmul.f32 %v950, %v946
    %v952 = vmul.f32 %v950, %v947
    %v953 = vmul.f32 %v950, %v948
    %v954 = vmul.f32 %v950, %v949
    %v955 = vadd.f32 %v875, %v951
    %v956 = vadd.f32 %v876, %v952
    %v957 = vadd.f32 %v877, %v953
    %v958 = vadd.f32 %v878, %v954
    %s959 = sld [smem:[#allocation7 + $0x2d]]
    %s960 = sld [smem:[#allocation6 + $0x2d]]
    %v961 = vstv %s960
    %v962 = vsub.f32 %v55, %v961
    %v963 = vsub.f32 %v56, %v961
    %v964 = vsub.f32 %v57, %v961
    %v965 = vsub.f32 %v58, %v961
    %v966 = vand.u32 2147483647, %v962
    %v967 = vand.u32 2147483647, %v963
    %v968 = vand.u32 2147483647, %v964
    %v969 = vand.u32 2147483647, %v965
    %v970 = vstv %s959
    %v971 = vmul.f32 %v970, %v966
    %v972 = vmul.f32 %v970, %v967
    %v973 = vmul.f32 %v970, %v968
    %v974 = vmul.f32 %v970, %v969
    %v975 = vadd.f32 %v895, %v971
    %v976 = vadd.f32 %v896, %v972
    %v977 = vadd.f32 %v897, %v973
    %v978 = vadd.f32 %v898, %v974
    %s979 = sld [smem:[#allocation7 + $0x2e]]
    %s980 = sld [smem:[#allocation6 + $0x2e]]
    %v981 = vstv %s980
    %v982 = vsub.f32 %v55, %v981
    %v983 = vsub.f32 %v56, %v981
    %v984 = vsub.f32 %v57, %v981
    %v985 = vsub.f32 %v58, %v981
    %v986 = vand.u32 2147483647, %v982
    %v987 = vand.u32 2147483647, %v983
    %v988 = vand.u32 2147483647, %v984
    %v989 = vand.u32 2147483647, %v985
    %v990 = vstv %s979
    %v991 = vmul.f32 %v990, %v986
    %v992 = vmul.f32 %v990, %v987
    %v993 = vmul.f32 %v990, %v988
    %v994 = vmul.f32 %v990, %v989
    %v995 = vadd.f32 %v915, %v991
    %v996 = vadd.f32 %v916, %v992
    %v997 = vadd.f32 %v917, %v993
    %v998 = vadd.f32 %v918, %v994
    %s999 = sld [smem:[#allocation7 + $0x2f]]
    %s1000 = sld [smem:[#allocation6 + $0x2f]]
    %v1001 = vstv %s1000
    %v1002 = vsub.f32 %v55, %v1001
    %v1003 = vsub.f32 %v56, %v1001
    %v1004 = vsub.f32 %v57, %v1001
    %v1005 = vsub.f32 %v58, %v1001
    %v1006 = vand.u32 2147483647, %v1002
    %v1007 = vand.u32 2147483647, %v1003
    %v1008 = vand.u32 2147483647, %v1004
    %v1009 = vand.u32 2147483647, %v1005
    %v1010 = vstv %s999
    %v1011 = vmul.f32 %v1010, %v1006
    %v1012 = vmul.f32 %v1010, %v1007
    %v1013 = vmul.f32 %v1010, %v1008
    %v1014 = vmul.f32 %v1010, %v1009
    %v1015 = vadd.f32 %v935, %v1011
    %v1016 = vadd.f32 %v936, %v1012
    %v1017 = vadd.f32 %v937, %v1013
    %v1018 = vadd.f32 %v938, %v1014
    %s1019 = sld [smem:[#allocation7 + $0x30]]
    %s1020 = sld [smem:[#allocation6 + $0x30]]
    %v1021 = vstv %s1020
    %v1022 = vsub.f32 %v55, %v1021
    %v1023 = vsub.f32 %v56, %v1021
    %v1024 = vsub.f32 %v57, %v1021
    %v1025 = vsub.f32 %v58, %v1021
    %v1026 = vand.u32 2147483647, %v1022
    %v1027 = vand.u32 2147483647, %v1023
    %v1028 = vand.u32 2147483647, %v1024
    %v1029 = vand.u32 2147483647, %v1025
    %v1030 = vstv %s1019
    %v1031 = vmul.f32 %v1030, %v1026
    %v1032 = vmul.f32 %v1030, %v1027
    %v1033 = vmul.f32 %v1030, %v1028
    %v1034 = vmul.f32 %v1030, %v1029
    %v1035 = vadd.f32 %v955, %v1031
    %v1036 = vadd.f32 %v956, %v1032
    %v1037 = vadd.f32 %v957, %v1033
    %v1038 = vadd.f32 %v958, %v1034
    %s1039 = sld [smem:[#allocation7 + $0x31]]
    %s1040 = sld [smem:[#allocation6 + $0x31]]
    %v1041 = vstv %s1040
    %v1042 = vsub.f32 %v55, %v1041
    %v1043 = vsub.f32 %v56, %v1041
    %v1044 = vsub.f32 %v57, %v1041
    %v1045 = vsub.f32 %v58, %v1041
    %v1046 = vand.u32 2147483647, %v1042
    %v1047 = vand.u32 2147483647, %v1043
    %v1048 = vand.u32 2147483647, %v1044
    %v1049 = vand.u32 2147483647, %v1045
    %v1050 = vstv %s1039
    %v1051 = vmul.f32 %v1050, %v1046
    %v1052 = vmul.f32 %v1050, %v1047
    %v1053 = vmul.f32 %v1050, %v1048
    %v1054 = vmul.f32 %v1050, %v1049
    %v1055 = vadd.f32 %v975, %v1051
    %v1056 = vadd.f32 %v976, %v1052
    %v1057 = vadd.f32 %v977, %v1053
    %v1058 = vadd.f32 %v978, %v1054
    %s1059 = sld [smem:[#allocation7 + $0x32]]
    %s1060 = sld [smem:[#allocation6 + $0x32]]
    %v1061 = vstv %s1060
    %v1062 = vsub.f32 %v55, %v1061
    %v1063 = vsub.f32 %v56, %v1061
    %v1064 = vsub.f32 %v57, %v1061
    %v1065 = vsub.f32 %v58, %v1061
    %v1066 = vand.u32 2147483647, %v1062
    %v1067 = vand.u32 2147483647, %v1063
    %v1068 = vand.u32 2147483647, %v1064
    %v1069 = vand.u32 2147483647, %v1065
    %v1070 = vstv %s1059
    %v1071 = vmul.f32 %v1070, %v1066
    %v1072 = vmul.f32 %v1070, %v1067
    %v1073 = vmul.f32 %v1070, %v1068
    %v1074 = vmul.f32 %v1070, %v1069
    %v1075 = vadd.f32 %v995, %v1071
    %v1076 = vadd.f32 %v996, %v1072
    %v1077 = vadd.f32 %v997, %v1073
    %v1078 = vadd.f32 %v998, %v1074
    %s1079 = sld [smem:[#allocation7 + $0x33]]
    %s1080 = sld [smem:[#allocation6 + $0x33]]
    %v1081 = vstv %s1080
    %v1082 = vsub.f32 %v55, %v1081
    %v1083 = vsub.f32 %v56, %v1081
    %v1084 = vsub.f32 %v57, %v1081
    %v1085 = vsub.f32 %v58, %v1081
    %v1086 = vand.u32 2147483647, %v1082
    %v1087 = vand.u32 2147483647, %v1083
    %v1088 = vand.u32 2147483647, %v1084
    %v1089 = vand.u32 2147483647, %v1085
    %v1090 = vstv %s1079
    %v1091 = vmul.f32 %v1090, %v1086
    %v1092 = vmul.f32 %v1090, %v1087
    %v1093 = vmul.f32 %v1090, %v1088
    %v1094 = vmul.f32 %v1090, %v1089
    %v1095 = vadd.f32 %v1015, %v1091
    %v1096 = vadd.f32 %v1016, %v1092
    %v1097 = vadd.f32 %v1017, %v1093
    %v1098 = vadd.f32 %v1018, %v1094
    %s1099 = sld [smem:[#allocation7 + $0x34]]
    %s1100 = sld [smem:[#allocation6 + $0x34]]
    %v1101 = vstv %s1100
    %v1102 = vsub.f32 %v55, %v1101
    %v1103 = vsub.f32 %v56, %v1101
    %v1104 = vsub.f32 %v57, %v1101
    %v1105 = vsub.f32 %v58, %v1101
    %v1106 = vand.u32 2147483647, %v1102
    %v1107 = vand.u32 2147483647, %v1103
    %v1108 = vand.u32 2147483647, %v1104
    %v1109 = vand.u32 2147483647, %v1105
    %v1110 = vstv %s1099
    %v1111 = vmul.f32 %v1110, %v1106
    %v1112 = vmul.f32 %v1110, %v1107
    %v1113 = vmul.f32 %v1110, %v1108
    %v1114 = vmul.f32 %v1110, %v1109
    %v1115 = vadd.f32 %v1035, %v1111
    %v1116 = vadd.f32 %v1036, %v1112
    %v1117 = vadd.f32 %v1037, %v1113
    %v1118 = vadd.f32 %v1038, %v1114
    %s1119 = sld [smem:[#allocation7 + $0x35]]
    %s1120 = sld [smem:[#allocation6 + $0x35]]
    %v1121 = vstv %s1120
    %v1122 = vsub.f32 %v55, %v1121
    %v1123 = vsub.f32 %v56, %v1121
    %v1124 = vsub.f32 %v57, %v1121
    %v1125 = vsub.f32 %v58, %v1121
    %v1126 = vand.u32 2147483647, %v1122
    %v1127 = vand.u32 2147483647, %v1123
    %v1128 = vand.u32 2147483647, %v1124
    %v1129 = vand.u32 2147483647, %v1125
    %v1130 = vstv %s1119
    %v1131 = vmul.f32 %v1130, %v1126
    %v1132 = vmul.f32 %v1130, %v1127
    %v1133 = vmul.f32 %v1130, %v1128
    %v1134 = vmul.f32 %v1130, %v1129
    %v1135 = vadd.f32 %v1055, %v1131
    %v1136 = vadd.f32 %v1056, %v1132
    %v1137 = vadd.f32 %v1057, %v1133
    %v1138 = vadd.f32 %v1058, %v1134
    %s1139 = sld [smem:[#allocation7 + $0x36]]
    %s1140 = sld [smem:[#allocation6 + $0x36]]
    %v1141 = vstv %s1140
    %v1142 = vsub.f32 %v55, %v1141
    %v1143 = vsub.f32 %v56, %v1141
    %v1144 = vsub.f32 %v57, %v1141
    %v1145 = vsub.f32 %v58, %v1141
    %v1146 = vand.u32 2147483647, %v1142
    %v1147 = vand.u32 2147483647, %v1143
    %v1148 = vand.u32 2147483647, %v1144
    %v1149 = vand.u32 2147483647, %v1145
    %v1150 = vstv %s1139
    %v1151 = vmul.f32 %v1150, %v1146
    %v1152 = vmul.f32 %v1150, %v1147
    %v1153 = vmul.f32 %v1150, %v1148
    %v1154 = vmul.f32 %v1150, %v1149
    %v1155 = vadd.f32 %v1075, %v1151
    %v1156 = vadd.f32 %v1076, %v1152
    %v1157 = vadd.f32 %v1077, %v1153
    %v1158 = vadd.f32 %v1078, %v1154
    %s1159 = sld [smem:[#allocation7 + $0x37]]
    %s1160 = sld [smem:[#allocation6 + $0x37]]
    %v1161 = vstv %s1160
    %v1162 = vsub.f32 %v55, %v1161
    %v1163 = vsub.f32 %v56, %v1161
    %v1164 = vsub.f32 %v57, %v1161
    %v1165 = vsub.f32 %v58, %v1161
    %v1166 = vand.u32 2147483647, %v1162
    %v1167 = vand.u32 2147483647, %v1163
    %v1168 = vand.u32 2147483647, %v1164
    %v1169 = vand.u32 2147483647, %v1165
    %v1170 = vstv %s1159
    %v1171 = vmul.f32 %v1170, %v1166
    %v1172 = vmul.f32 %v1170, %v1167
    %v1173 = vmul.f32 %v1170, %v1168
    %v1174 = vmul.f32 %v1170, %v1169
    %v1175 = vadd.f32 %v1095, %v1171
    %v1176 = vadd.f32 %v1096, %v1172
    %v1177 = vadd.f32 %v1097, %v1173
    %v1178 = vadd.f32 %v1098, %v1174
    %s1179 = sld [smem:[#allocation7 + $0x38]]
    %s1180 = sld [smem:[#allocation6 + $0x38]]
    %v1181 = vstv %s1180
    %v1182 = vsub.f32 %v55, %v1181
    %v1183 = vsub.f32 %v56, %v1181
    %v1184 = vsub.f32 %v57, %v1181
    %v1185 = vsub.f32 %v58, %v1181
    %v1186 = vand.u32 2147483647, %v1182
    %v1187 = vand.u32 2147483647, %v1183
    %v1188 = vand.u32 2147483647, %v1184
    %v1189 = vand.u32 2147483647, %v1185
    %v1190 = vstv %s1179
    %v1191 = vmul.f32 %v1190, %v1186
    %v1192 = vmul.f32 %v1190, %v1187
    %v1193 = vmul.f32 %v1190, %v1188
    %v1194 = vmul.f32 %v1190, %v1189
    %v1195 = vadd.f32 %v1115, %v1191
    %v1196 = vadd.f32 %v1116, %v1192
    %v1197 = vadd.f32 %v1117, %v1193
    %v1198 = vadd.f32 %v1118, %v1194
    %s1199 = sld [smem:[#allocation7 + $0x39]]
    %s1200 = sld [smem:[#allocation6 + $0x39]]
    %v1201 = vstv %s1200
    %v1202 = vsub.f32 %v55, %v1201
    %v1203 = vsub.f32 %v56, %v1201
    %v1204 = vsub.f32 %v57, %v1201
    %v1205 = vsub.f32 %v58, %v1201
    %v1206 = vand.u32 2147483647, %v1202
    %v1207 = vand.u32 2147483647, %v1203
    %v1208 = vand.u32 2147483647, %v1204
    %v1209 = vand.u32 2147483647, %v1205
    %v1210 = vstv %s1199
    %v1211 = vmul.f32 %v1210, %v1206
    %v1212 = vmul.f32 %v1210, %v1207
    %v1213 = vmul.f32 %v1210, %v1208
    %v1214 = vmul.f32 %v1210, %v1209
    %v1215 = vadd.f32 %v1135, %v1211
    %v1216 = vadd.f32 %v1136, %v1212
    %v1217 = vadd.f32 %v1137, %v1213
    %v1218 = vadd.f32 %v1138, %v1214
    %s1219 = sld [smem:[#allocation7 + $0x3a]]
    %s1220 = sld [smem:[#allocation6 + $0x3a]]
    %v1221 = vstv %s1220
    %v1222 = vsub.f32 %v55, %v1221
    %v1223 = vsub.f32 %v56, %v1221
    %v1224 = vsub.f32 %v57, %v1221
    %v1225 = vsub.f32 %v58, %v1221
    %v1226 = vand.u32 2147483647, %v1222
    %v1227 = vand.u32 2147483647, %v1223
    %v1228 = vand.u32 2147483647, %v1224
    %v1229 = vand.u32 2147483647, %v1225
    %v1230 = vstv %s1219
    %v1231 = vmul.f32 %v1230, %v1226
    %v1232 = vmul.f32 %v1230, %v1227
    %v1233 = vmul.f32 %v1230, %v1228
    %v1234 = vmul.f32 %v1230, %v1229
    %v1235 = vadd.f32 %v1155, %v1231
    %v1236 = vadd.f32 %v1156, %v1232
    %v1237 = vadd.f32 %v1157, %v1233
    %v1238 = vadd.f32 %v1158, %v1234
    %s1239 = sld [smem:[#allocation7 + $0x3b]]
    %s1240 = sld [smem:[#allocation6 + $0x3b]]
    %v1241 = vstv %s1240
    %v1242 = vsub.f32 %v55, %v1241
    %v1243 = vsub.f32 %v56, %v1241
    %v1244 = vsub.f32 %v57, %v1241
    %v1245 = vsub.f32 %v58, %v1241
    %v1246 = vand.u32 2147483647, %v1242
    %v1247 = vand.u32 2147483647, %v1243
    %v1248 = vand.u32 2147483647, %v1244
    %v1249 = vand.u32 2147483647, %v1245
    %v1250 = vstv %s1239
    %v1251 = vmul.f32 %v1250, %v1246
    %v1252 = vmul.f32 %v1250, %v1247
    %v1253 = vmul.f32 %v1250, %v1248
    %v1254 = vmul.f32 %v1250, %v1249
    %v1255 = vadd.f32 %v1175, %v1251
    %v1256 = vadd.f32 %v1176, %v1252
    %v1257 = vadd.f32 %v1177, %v1253
    %v1258 = vadd.f32 %v1178, %v1254
    %s1259 = sld [smem:[#allocation7 + $0x3c]]
    %s1260 = sld [smem:[#allocation6 + $0x3c]]
    %v1261 = vstv %s1260
    %v1262 = vsub.f32 %v55, %v1261
    %v1263 = vsub.f32 %v56, %v1261
    %v1264 = vsub.f32 %v57, %v1261
    %v1265 = vsub.f32 %v58, %v1261
    %v1266 = vand.u32 2147483647, %v1262
    %v1267 = vand.u32 2147483647, %v1263
    %v1268 = vand.u32 2147483647, %v1264
    %v1269 = vand.u32 2147483647, %v1265
    %v1270 = vstv %s1259
    %v1271 = vmul.f32 %v1270, %v1266
    %v1272 = vmul.f32 %v1270, %v1267
    %v1273 = vmul.f32 %v1270, %v1268
    %v1274 = vmul.f32 %v1270, %v1269
    %v1275 = vadd.f32 %v1195, %v1271
    %v1276 = vadd.f32 %v1196, %v1272
    %v1277 = vadd.f32 %v1197, %v1273
    %v1278 = vadd.f32 %v1198, %v1274
    %s1279 = sld [smem:[#allocation7 + $0x3d]]
    %s1280 = sld [smem:[#allocation6 + $0x3d]]
    %v1281 = vstv %s1280
    %v1282 = vsub.f32 %v55, %v1281
    %v1283 = vsub.f32 %v56, %v1281
    %v1284 = vsub.f32 %v57, %v1281
    %v1285 = vsub.f32 %v58, %v1281
    %v1286 = vand.u32 2147483647, %v1282
    %v1287 = vand.u32 2147483647, %v1283
    %v1288 = vand.u32 2147483647, %v1284
    %v1289 = vand.u32 2147483647, %v1285
    %v1290 = vstv %s1279
    %v1291 = vmul.f32 %v1290, %v1286
    %v1292 = vmul.f32 %v1290, %v1287
    %v1293 = vmul.f32 %v1290, %v1288
    %v1294 = vmul.f32 %v1290, %v1289
    %v1295 = vadd.f32 %v1215, %v1291
    %v1296 = vadd.f32 %v1216, %v1292
    %v1297 = vadd.f32 %v1217, %v1293
    %v1298 = vadd.f32 %v1218, %v1294
    %s1299 = sld [smem:[#allocation7 + $0x3e]]
    %s1300 = sld [smem:[#allocation6 + $0x3e]]
    %v1301 = vstv %s1300
    %v1302 = vsub.f32 %v55, %v1301
    %v1303 = vsub.f32 %v56, %v1301
    %v1304 = vsub.f32 %v57, %v1301
    %v1305 = vsub.f32 %v58, %v1301
    %v1306 = vand.u32 2147483647, %v1302
    %v1307 = vand.u32 2147483647, %v1303
    %v1308 = vand.u32 2147483647, %v1304
    %v1309 = vand.u32 2147483647, %v1305
    %v1310 = vstv %s1299
    %v1311 = vmul.f32 %v1310, %v1306
    %v1312 = vmul.f32 %v1310, %v1307
    %v1313 = vmul.f32 %v1310, %v1308
    %v1314 = vmul.f32 %v1310, %v1309
    %v1315 = vadd.f32 %v1235, %v1311
    %v1316 = vadd.f32 %v1236, %v1312
    %v1317 = vadd.f32 %v1237, %v1313
    %v1318 = vadd.f32 %v1238, %v1314
    %s1319 = sld [smem:[#allocation7 + $0x3f]]
    %s1320 = sld [smem:[#allocation6 + $0x3f]]
    %v1321 = vstv %s1320
    %v1322 = vsub.f32 %v55, %v1321
    %v1323 = vsub.f32 %v56, %v1321
    %v1324 = vsub.f32 %v57, %v1321
    %v1325 = vsub.f32 %v58, %v1321
    %v1326 = vand.u32 2147483647, %v1322
    %v1327 = vand.u32 2147483647, %v1323
    %v1328 = vand.u32 2147483647, %v1324
    %v1329 = vand.u32 2147483647, %v1325
    %v1330 = vstv %s1319
    %v1331 = vmul.f32 %v1330, %v1326
    %v1332 = vmul.f32 %v1330, %v1327
    %v1333 = vmul.f32 %v1330, %v1328
    %v1334 = vmul.f32 %v1330, %v1329
    %v1335 = vadd.f32 %v1255, %v1331
    %v1336 = vadd.f32 %v1256, %v1332
    %v1337 = vadd.f32 %v1257, %v1333
    %v1338 = vadd.f32 %v1258, %v1334
    %s1339 = sld [smem:[#allocation7 + $0x40]]
    %s1340 = sld [smem:[#allocation6 + $0x40]]
    %v1341 = vstv %s1340
    %v1342 = vsub.f32 %v55, %v1341
    %v1343 = vsub.f32 %v56, %v1341
    %v1344 = vsub.f32 %v57, %v1341
    %v1345 = vsub.f32 %v58, %v1341
    %v1346 = vand.u32 2147483647, %v1342
    %v1347 = vand.u32 2147483647, %v1343
    %v1348 = vand.u32 2147483647, %v1344
    %v1349 = vand.u32 2147483647, %v1345
    %v1350 = vstv %s1339
    %v1351 = vmul.f32 %v1350, %v1346
    %v1352 = vmul.f32 %v1350, %v1347
    %v1353 = vmul.f32 %v1350, %v1348
    %v1354 = vmul.f32 %v1350, %v1349
    %v1355 = vadd.f32 %v1275, %v1351
    %v1356 = vadd.f32 %v1276, %v1352
    %v1357 = vadd.f32 %v1277, %v1353
    %v1358 = vadd.f32 %v1278, %v1354
    %s1359 = sld [smem:[#allocation7 + $0x41]]
    %s1360 = sld [smem:[#allocation6 + $0x41]]
    %v1361 = vstv %s1360
    %v1362 = vsub.f32 %v55, %v1361
    %v1363 = vsub.f32 %v56, %v1361
    %v1364 = vsub.f32 %v57, %v1361
    %v1365 = vsub.f32 %v58, %v1361
    %v1366 = vand.u32 2147483647, %v1362
    %v1367 = vand.u32 2147483647, %v1363
    %v1368 = vand.u32 2147483647, %v1364
    %v1369 = vand.u32 2147483647, %v1365
    %v1370 = vstv %s1359
    %v1371 = vmul.f32 %v1370, %v1366
    %v1372 = vmul.f32 %v1370, %v1367
    %v1373 = vmul.f32 %v1370, %v1368
    %v1374 = vmul.f32 %v1370, %v1369
    %v1375 = vadd.f32 %v1295, %v1371
    %v1376 = vadd.f32 %v1296, %v1372
    %v1377 = vadd.f32 %v1297, %v1373
    %v1378 = vadd.f32 %v1298, %v1374
    %s1379 = sld [smem:[#allocation7 + $0x42]]
    %s1380 = sld [smem:[#allocation6 + $0x42]]
    %v1381 = vstv %s1380
    %v1382 = vsub.f32 %v55, %v1381
    %v1383 = vsub.f32 %v56, %v1381
    %v1384 = vsub.f32 %v57, %v1381
    %v1385 = vsub.f32 %v58, %v1381
    %v1386 = vand.u32 2147483647, %v1382
    %v1387 = vand.u32 2147483647, %v1383
    %v1388 = vand.u32 2147483647, %v1384
    %v1389 = vand.u32 2147483647, %v1385
    %v1390 = vstv %s1379
    %v1391 = vmul.f32 %v1390, %v1386
    %v1392 = vmul.f32 %v1390, %v1387
    %v1393 = vmul.f32 %v1390, %v1388
    %v1394 = vmul.f32 %v1390, %v1389
    %v1395 = vadd.f32 %v1315, %v1391
    %v1396 = vadd.f32 %v1316, %v1392
    %v1397 = vadd.f32 %v1317, %v1393
    %v1398 = vadd.f32 %v1318, %v1394
    %s1399 = sld [smem:[#allocation7 + $0x43]]
    %s1400 = sld [smem:[#allocation6 + $0x43]]
    %v1401 = vstv %s1400
    %v1402 = vsub.f32 %v55, %v1401
    %v1403 = vsub.f32 %v56, %v1401
    %v1404 = vsub.f32 %v57, %v1401
    %v1405 = vsub.f32 %v58, %v1401
    %v1406 = vand.u32 2147483647, %v1402
    %v1407 = vand.u32 2147483647, %v1403
    %v1408 = vand.u32 2147483647, %v1404
    %v1409 = vand.u32 2147483647, %v1405
    %v1410 = vstv %s1399
    %v1411 = vmul.f32 %v1410, %v1406
    %v1412 = vmul.f32 %v1410, %v1407
    %v1413 = vmul.f32 %v1410, %v1408
    %v1414 = vmul.f32 %v1410, %v1409
    %v1415 = vadd.f32 %v1335, %v1411
    %v1416 = vadd.f32 %v1336, %v1412
    %v1417 = vadd.f32 %v1337, %v1413
    %v1418 = vadd.f32 %v1338, %v1414
    %s1419 = sld [smem:[#allocation7 + $0x44]]
    %s1420 = sld [smem:[#allocation6 + $0x44]]
    %v1421 = vstv %s1420
    %v1422 = vsub.f32 %v55, %v1421
    %v1423 = vsub.f32 %v56, %v1421
    %v1424 = vsub.f32 %v57, %v1421
    %v1425 = vsub.f32 %v58, %v1421
    %v1426 = vand.u32 2147483647, %v1422
    %v1427 = vand.u32 2147483647, %v1423
    %v1428 = vand.u32 2147483647, %v1424
    %v1429 = vand.u32 2147483647, %v1425
    %v1430 = vstv %s1419
    %v1431 = vmul.f32 %v1430, %v1426
    %v1432 = vmul.f32 %v1430, %v1427
    %v1433 = vmul.f32 %v1430, %v1428
    %v1434 = vmul.f32 %v1430, %v1429
    %v1435 = vadd.f32 %v1355, %v1431
    %v1436 = vadd.f32 %v1356, %v1432
    %v1437 = vadd.f32 %v1357, %v1433
    %v1438 = vadd.f32 %v1358, %v1434
    %s1439 = sld [smem:[#allocation7 + $0x45]]
    %s1440 = sld [smem:[#allocation6 + $0x45]]
    %v1441 = vstv %s1440
    %v1442 = vsub.f32 %v55, %v1441
    %v1443 = vsub.f32 %v56, %v1441
    %v1444 = vsub.f32 %v57, %v1441
    %v1445 = vsub.f32 %v58, %v1441
    %v1446 = vand.u32 2147483647, %v1442
    %v1447 = vand.u32 2147483647, %v1443
    %v1448 = vand.u32 2147483647, %v1444
    %v1449 = vand.u32 2147483647, %v1445
    %v1450 = vstv %s1439
    %v1451 = vmul.f32 %v1450, %v1446
    %v1452 = vmul.f32 %v1450, %v1447
    %v1453 = vmul.f32 %v1450, %v1448
    %v1454 = vmul.f32 %v1450, %v1449
    %v1455 = vadd.f32 %v1375, %v1451
    %v1456 = vadd.f32 %v1376, %v1452
    %v1457 = vadd.f32 %v1377, %v1453
    %v1458 = vadd.f32 %v1378, %v1454
    %s1459 = sld [smem:[#allocation7 + $0x46]]
    %s1460 = sld [smem:[#allocation6 + $0x46]]
    %v1461 = vstv %s1460
    %v1462 = vsub.f32 %v55, %v1461
    %v1463 = vsub.f32 %v56, %v1461
    %v1464 = vsub.f32 %v57, %v1461
    %v1465 = vsub.f32 %v58, %v1461
    %v1466 = vand.u32 2147483647, %v1462
    %v1467 = vand.u32 2147483647, %v1463
    %v1468 = vand.u32 2147483647, %v1464
    %v1469 = vand.u32 2147483647, %v1465
    %v1470 = vstv %s1459
    %v1471 = vmul.f32 %v1470, %v1466
    %v1472 = vmul.f32 %v1470, %v1467
    %v1473 = vmul.f32 %v1470, %v1468
    %v1474 = vmul.f32 %v1470, %v1469
    %v1475 = vadd.f32 %v1395, %v1471
    %v1476 = vadd.f32 %v1396, %v1472
    %v1477 = vadd.f32 %v1397, %v1473
    %v1478 = vadd.f32 %v1398, %v1474
    %s1479 = sld [smem:[#allocation7 + $0x47]]
    %s1480 = sld [smem:[#allocation6 + $0x47]]
    %v1481 = vstv %s1480
    %v1482 = vsub.f32 %v55, %v1481
    %v1483 = vsub.f32 %v56, %v1481
    %v1484 = vsub.f32 %v57, %v1481
    %v1485 = vsub.f32 %v58, %v1481
    %v1486 = vand.u32 2147483647, %v1482
    %v1487 = vand.u32 2147483647, %v1483
    %v1488 = vand.u32 2147483647, %v1484
    %v1489 = vand.u32 2147483647, %v1485
    %v1490 = vstv %s1479
    %v1491 = vmul.f32 %v1490, %v1486
    %v1492 = vmul.f32 %v1490, %v1487
    %v1493 = vmul.f32 %v1490, %v1488
    %v1494 = vmul.f32 %v1490, %v1489
    %v1495 = vadd.f32 %v1415, %v1491
    %v1496 = vadd.f32 %v1416, %v1492
    %v1497 = vadd.f32 %v1417, %v1493
    %v1498 = vadd.f32 %v1418, %v1494
    %s1499 = sld [smem:[#allocation7 + $0x48]]
    %s1500 = sld [smem:[#allocation6 + $0x48]]
    %v1501 = vstv %s1500
    %v1502 = vsub.f32 %v55, %v1501
    %v1503 = vsub.f32 %v56, %v1501
    %v1504 = vsub.f32 %v57, %v1501
    %v1505 = vsub.f32 %v58, %v1501
    %v1506 = vand.u32 2147483647, %v1502
    %v1507 = vand.u32 2147483647, %v1503
    %v1508 = vand.u32 2147483647, %v1504
    %v1509 = vand.u32 2147483647, %v1505
    %v1510 = vstv %s1499
    %v1511 = vmul.f32 %v1510, %v1506
    %v1512 = vmul.f32 %v1510, %v1507
    %v1513 = vmul.f32 %v1510, %v1508
    %v1514 = vmul.f32 %v1510, %v1509
    %v1515 = vadd.f32 %v1435, %v1511
    %v1516 = vadd.f32 %v1436, %v1512
    %v1517 = vadd.f32 %v1437, %v1513
    %v1518 = vadd.f32 %v1438, %v1514
    %s1519 = sld [smem:[#allocation7 + $0x49]]
    %s1520 = sld [smem:[#allocation6 + $0x49]]
    %v1521 = vstv %s1520
    %v1522 = vsub.f32 %v55, %v1521
    %v1523 = vsub.f32 %v56, %v1521
    %v1524 = vsub.f32 %v57, %v1521
    %v1525 = vsub.f32 %v58, %v1521
    %v1526 = vand.u32 2147483647, %v1522
    %v1527 = vand.u32 2147483647, %v1523
    %v1528 = vand.u32 2147483647, %v1524
    %v1529 = vand.u32 2147483647, %v1525
    %v1530 = vstv %s1519
    %v1531 = vmul.f32 %v1530, %v1526
    %v1532 = vmul.f32 %v1530, %v1527
    %v1533 = vmul.f32 %v1530, %v1528
    %v1534 = vmul.f32 %v1530, %v1529
    %v1535 = vadd.f32 %v1455, %v1531
    %v1536 = vadd.f32 %v1456, %v1532
    %v1537 = vadd.f32 %v1457, %v1533
    %v1538 = vadd.f32 %v1458, %v1534
    %s1539 = sld [smem:[#allocation7 + $0x4a]]
    %s1540 = sld [smem:[#allocation6 + $0x4a]]
    %v1541 = vstv %s1540
    %v1542 = vsub.f32 %v55, %v1541
    %v1543 = vsub.f32 %v56, %v1541
    %v1544 = vsub.f32 %v57, %v1541
    %v1545 = vsub.f32 %v58, %v1541
    %v1546 = vand.u32 2147483647, %v1542
    %v1547 = vand.u32 2147483647, %v1543
    %v1548 = vand.u32 2147483647, %v1544
    %v1549 = vand.u32 2147483647, %v1545
    %v1550 = vstv %s1539
    %v1551 = vmul.f32 %v1550, %v1546
    %v1552 = vmul.f32 %v1550, %v1547
    %v1553 = vmul.f32 %v1550, %v1548
    %v1554 = vmul.f32 %v1550, %v1549
    %v1555 = vadd.f32 %v1475, %v1551
    %v1556 = vadd.f32 %v1476, %v1552
    %v1557 = vadd.f32 %v1477, %v1553
    %v1558 = vadd.f32 %v1478, %v1554
    %s1559 = sld [smem:[#allocation7 + $0x4b]]
    %s1560 = sld [smem:[#allocation6 + $0x4b]]
    %v1561 = vstv %s1560
    %v1562 = vsub.f32 %v55, %v1561
    %v1563 = vsub.f32 %v56, %v1561
    %v1564 = vsub.f32 %v57, %v1561
    %v1565 = vsub.f32 %v58, %v1561
    %v1566 = vand.u32 2147483647, %v1562
    %v1567 = vand.u32 2147483647, %v1563
    %v1568 = vand.u32 2147483647, %v1564
    %v1569 = vand.u32 2147483647, %v1565
    %v1570 = vstv %s1559
    %v1571 = vmul.f32 %v1570, %v1566
    %v1572 = vmul.f32 %v1570, %v1567
    %v1573 = vmul.f32 %v1570, %v1568
    %v1574 = vmul.f32 %v1570, %v1569
    %v1575 = vadd.f32 %v1495, %v1571
    %v1576 = vadd.f32 %v1496, %v1572
    %v1577 = vadd.f32 %v1497, %v1573
    %v1578 = vadd.f32 %v1498, %v1574
    %s1579 = sld [smem:[#allocation7 + $0x4c]]
    %s1580 = sld [smem:[#allocation6 + $0x4c]]
    %v1581 = vstv %s1580
    %v1582 = vsub.f32 %v55, %v1581
    %v1583 = vsub.f32 %v56, %v1581
    %v1584 = vsub.f32 %v57, %v1581
    %v1585 = vsub.f32 %v58, %v1581
    %v1586 = vand.u32 2147483647, %v1582
    %v1587 = vand.u32 2147483647, %v1583
    %v1588 = vand.u32 2147483647, %v1584
    %v1589 = vand.u32 2147483647, %v1585
    %v1590 = vstv %s1579
    %v1591 = vmul.f32 %v1590, %v1586
    %v1592 = vmul.f32 %v1590, %v1587
    %v1593 = vmul.f32 %v1590, %v1588
    %v1594 = vmul.f32 %v1590, %v1589
    %v1595 = vadd.f32 %v1515, %v1591
    %v1596 = vadd.f32 %v1516, %v1592
    %v1597 = vadd.f32 %v1517, %v1593
    %v1598 = vadd.f32 %v1518, %v1594
    %s1599 = sld [smem:[#allocation7 + $0x4d]]
    %s1600 = sld [smem:[#allocation6 + $0x4d]]
    %v1601 = vstv %s1600
    %v1602 = vsub.f32 %v55, %v1601
    %v1603 = vsub.f32 %v56, %v1601
    %v1604 = vsub.f32 %v57, %v1601
    %v1605 = vsub.f32 %v58, %v1601
    %v1606 = vand.u32 2147483647, %v1602
    %v1607 = vand.u32 2147483647, %v1603
    %v1608 = vand.u32 2147483647, %v1604
    %v1609 = vand.u32 2147483647, %v1605
    %v1610 = vstv %s1599
    %v1611 = vmul.f32 %v1610, %v1606
    %v1612 = vmul.f32 %v1610, %v1607
    %v1613 = vmul.f32 %v1610, %v1608
    %v1614 = vmul.f32 %v1610, %v1609
    %v1615 = vadd.f32 %v1535, %v1611
    %v1616 = vadd.f32 %v1536, %v1612
    %v1617 = vadd.f32 %v1537, %v1613
    %v1618 = vadd.f32 %v1538, %v1614
    %s1619 = sld [smem:[#allocation7 + $0x4e]]
    %s1620 = sld [smem:[#allocation6 + $0x4e]]
    %v1621 = vstv %s1620
    %v1622 = vsub.f32 %v55, %v1621
    %v1623 = vsub.f32 %v56, %v1621
    %v1624 = vsub.f32 %v57, %v1621
    %v1625 = vsub.f32 %v58, %v1621
    %v1626 = vand.u32 2147483647, %v1622
    %v1627 = vand.u32 2147483647, %v1623
    %v1628 = vand.u32 2147483647, %v1624
    %v1629 = vand.u32 2147483647, %v1625
    %v1630 = vstv %s1619
    %v1631 = vmul.f32 %v1630, %v1626
    %v1632 = vmul.f32 %v1630, %v1627
    %v1633 = vmul.f32 %v1630, %v1628
    %v1634 = vmul.f32 %v1630, %v1629
    %v1635 = vadd.f32 %v1555, %v1631
    %v1636 = vadd.f32 %v1556, %v1632
    %v1637 = vadd.f32 %v1557, %v1633
    %v1638 = vadd.f32 %v1558, %v1634
    %s1639 = sld [smem:[#allocation7 + $0x4f]]
    %s1640 = sld [smem:[#allocation6 + $0x4f]]
    %v1641 = vstv %s1640
    %v1642 = vsub.f32 %v55, %v1641
    %v1643 = vsub.f32 %v56, %v1641
    %v1644 = vsub.f32 %v57, %v1641
    %v1645 = vsub.f32 %v58, %v1641
    %v1646 = vand.u32 2147483647, %v1642
    %v1647 = vand.u32 2147483647, %v1643
    %v1648 = vand.u32 2147483647, %v1644
    %v1649 = vand.u32 2147483647, %v1645
    %v1650 = vstv %s1639
    %v1651 = vmul.f32 %v1650, %v1646
    %v1652 = vmul.f32 %v1650, %v1647
    %v1653 = vmul.f32 %v1650, %v1648
    %v1654 = vmul.f32 %v1650, %v1649
    %v1655 = vadd.f32 %v1575, %v1651
    %v1656 = vadd.f32 %v1576, %v1652
    %v1657 = vadd.f32 %v1577, %v1653
    %v1658 = vadd.f32 %v1578, %v1654
    %v1659 = vmul.f32 %v55, 0.1
    %v1660 = vmul.f32 %v56, 0.1
    %v1661 = vmul.f32 %v57, 0.1
    %v1662 = vmul.f32 %v58, 0.1
    %v1663 = vmul.f32 %v1659, %v1659
    %v1664 = vmul.f32 %v1660, %v1660
    %v1665 = vmul.f32 %v1661, %v1661
    %v1666 = vmul.f32 %v1662, %v1662
    %v1667 = vadd.f32 %v1595, %v1615
    %v1668 = vadd.f32 %v1596, %v1616
    %v1669 = vadd.f32 %v1597, %v1617
    %v1670 = vadd.f32 %v1598, %v1618
    %v1671 = vadd.f32 %v1635, %v1655
    %v1672 = vadd.f32 %v1636, %v1656
    %v1673 = vadd.f32 %v1637, %v1657
    %v1674 = vadd.f32 %v1638, %v1658
    %v1675 = vadd.f32 %v1667, %v1671
    %v1676 = vadd.f32 %v1668, %v1672
    %v1677 = vadd.f32 %v1669, %v1673
    %v1678 = vadd.f32 %v1670, %v1674
    %v1679 = vadd.f32 %v1663, %v1675
    %v1680 = vadd.f32 %v1664, %v1676
    %v1681 = vadd.f32 %v1665, %v1677
    %v1682 = vadd.f32 %v1666, %v1678
    %s1683 = smul.addr %s52, 8
    %s1684 = scalar_lea.vmem [#allocation9], %s1683
    %1685 = vst [vmem:[%s1684] sm:$0xff] %v1679
    %1686 = vst [vmem:[%s1684 + $0x8] sm:$0xff] %v1680
    %1687 = vst [vmem:[%s1684 + $0x10] sm:$0xff] %v1681
    %1688 = vst [vmem:[%s1684 + $0x18] sm:$0xff] %v1682
    // Predicated region
    $region26: #{tpu_custom_call.1} parent=1 // pred_check
      _
    $region27: #{tpu_custom_call.1} parent=1 // pred_check_branch
      %1690 = sbr.rel (0) target = $region29
    $region28: #{tpu_custom_call.1} parent=1 // pred_region
      %s1692 = ssub.s32 512, 512
      %1693 = vsyncadd [#allocation4], %s1692
      %s1695 = sshll.u32 [#allocation9], 4
      %s1696 = int_to_ptr.vmem [resolvable:$true] %s1695
      %1698 = dma.vmem_to_hbm [thread:$0]  %s1696, 512, %s3, [#allocation4]
    $region29: #{tpu_custom_call.1} parent=1 // pred_fallthru
      _
    // Predicated region
    $region30: #{tpu_custom_call.1} parent=1 // pred_check
      _
    $region31: #{tpu_custom_call.1} parent=1 // pred_check_branch
      %1700 = sbr.rel (0) target = $region33
    $region32: #{tpu_custom_call.1} parent=1 // pred_region
      %1701 = dma.done [#allocation4], 512
    $region33: #{tpu_custom_call.1} parent=1 // pred_fallthru
      _
    %1702 = vsyncpa [#allocation3], 1
    %1703 = vsyncpa [#allocation4], 1
    %1704 = vsyncpa [#allocation5], 1
    %1705 = vsyncpa [#allocation8], 1

</llo_original>
